<compile_context>
chip_gen: v7x
topology: tpu7x:2x2x1
jax: 0.10.0
libtpu: 0.0.40
codegen_flags: <defaults>
</compile_context>

<pallas_src>
import functools

import jax
import jax.numpy as jnp
from jax.experimental import pallas as pl
from jax.experimental.pallas import tpu as pltpu


# ----------------------------------------------------------------------------
# Fused forward kernel: one block of NB batch elements per grid step.
#   x_ref      : (NB, iC, L)   native channel-first input block
#   imask_ref  : (R, 1)        1.0 at interior rows, 0.0 at inter-element halos
#   eimask_ref : (R, 1)        1.0 at EVEN interior rows only
#   w*_ref     : (K, Cin, Cout) bf16 conv taps;  b*_ref : (1, Cout) f32
#   o_ref      : (NB, oC, L)
#   pad_*      : (R + 2*MARGIN, C) f32 VMEM scratch (logical rows at +MARGIN)
# where R = NB * PITCH, PITCH = L + 2*HALO.
# ----------------------------------------------------------------------------
def _fused_forward_kernel(x_ref, imask_ref, eimask_ref,
                          w1_ref, b1_ref, w2_ref, b2_ref,
                          w3_ref, b3_ref, w4_ref, b4_ref,
                          o_ref,
                          pad_x, pad_h, pad_h2,
                          *, K, NB, PITCH, HALO, MARGIN, L):
    R = NB * PITCH
    pad = (K - 1) // 2
    f32 = jnp.float32

    # --- one-time (per invocation) halo/margin zeroing ----------------------
    # pad_x: halos between elements provide the "same" conv padding; its
    # interiors are overwritten below, so zero the whole (narrow) buffer.
    # pad_h / pad_h2: interiors are always written via masked stores, only the
    # 8-row allocation margins (read by the outermost tap slices) need zeros.
    pad_x[...] = jnp.zeros_like(pad_x)
    zh = jnp.zeros((MARGIN, pad_h.shape[1]), f32)
    zh2 = jnp.zeros((MARGIN, pad_h2.shape[1]), f32)
    pad_h[0:MARGIN, :] = zh
    pad_h[MARGIN + R:MARGIN + R + MARGIN, :] = zh
    pad_h2[0:MARGIN, :] = zh2
    pad_h2[MARGIN + R:MARGIN + R + MARGIN, :] = zh2

    # --- stage input: in-kernel (iC, L) -> (L, iC) transpose per element ----
    for b in range(NB):
        base = MARGIN + b * PITCH + HALO
        pad_x[base:base + L, :] = jnp.transpose(x_ref[b])

    imask = imask_ref[...]     # (R, 1)
    eimask = eimask_ref[...]   # (R, 1)

    def conv(pad_ref, w_ref, b_ref, relu):
        # "same" 1D conv over ALL R logical rows of the folded batch, as K
        # full-tile bf16 matmuls with f32 accumulation.  Halo-row outputs are
        # garbage and are masked before ever being re-staged or stored.
        acc = None
        for k in range(K):                         # K static -> unrolled taps
            start = MARGIN - pad + k
            # TODO(synk): use pltpu.roll on the aligned tile (and a single
            # lane-concatenated im2col matmul) instead of the two sublane-
            # misaligned slice reads.
            xk = pad_ref[start:start + R, :].astype(jnp.bfloat16)
            term = jnp.dot(xk, w_ref[k], preferred_element_type=f32)
            acc = term if acc is None else acc + term
        out = acc + b_ref[...]                     # (1, Cout) f32 broadcast
        if relu:
            out = jnp.maximum(out, 0.0)
        return out                                 # (R, Cout) f32

    # enc1: iC -> H, stride 1, relu
    h1 = conv(pad_x, w1_ref, b1_ref, relu=True)
    pad_h[MARGIN:MARGIN + R, :] = h1 * imask

    # enc2 (stride 2) + nearest-neighbour x2 upsample, fused:
    # computing the stride-1 conv at every row and duplicating each even-row
    # result into the following odd row is identical to stride-2 + repeat.
    h2 = conv(pad_h, w2_ref, b2_ref, relu=True)
    he = h2 * eimask                               # keep even interior rows
    pad_h2[MARGIN:MARGIN + R, :] = he
    h2_prev = pad_h2[MARGIN - 1:MARGIN - 1 + R, :]  # value at logical row r-1
    pad_h2[MARGIN:MARGIN + R, :] = (he + h2_prev) * imask

    # dec1: 2H -> H, stride 1, relu
    h3 = conv(pad_h2, w3_ref, b3_ref, relu=True)
    pad_h[MARGIN:MARGIN + R, :] = h3 * imask       # reuse the H-wide scratch

    # out: H -> oC, linear.  Store per-element (oC, L) tiles: spatial dim is
    # the (lane-dense) minor dim and the result is already channel-first, so
    # no wrapper-side transpose / post-processing is needed.
    y = conv(pad_h, w4_ref, b4_ref, relu=False)    # (R, oC) f32
    for b in range(NB):
        base = b * PITCH + HALO
        yb = y[base:base + L, :]                   # (L, oC)
        o_ref[b] = jnp.transpose(yb).astype(o_ref.dtype)


# ----------------------------------------------------------------------------
# Wrapper: single pallas_call for the whole network.
# ----------------------------------------------------------------------------
def bayesnn_forward(params, x):
    """BayesNN.forward: delegates to the dense encoder-decoder model.

    x : (N, iC, iH)  ->  (N, oC, iH)
    """
    N, Cin, L = x.shape
    w1, b1 = params["enc1"]
    w2, b2 = params["enc2"]
    w3, b3 = params["dec1"]
    w4, b4 = params["out"]

    K = w1.shape[2]
    assert K % 2 == 1, "'same' padding trick assumes odd K"
    assert all(w.shape[2] == K for w in (w2, w3, w4))
    assert L % 2 == 0, "stride-2 + x2 upsample needs even spatial length"
    H, H2, oC = w1.shape[0], w2.shape[0], w4.shape[0]
    assert w2.shape[1] == H and w3.shape[1] == H2
    assert w3.shape[0] == H and w4.shape[1] == H

    HALO = 8                      # per-element zero halo inside the pitch
    MARGIN = 8                    # scratch overhang for the +/-pad tap slices
    assert (K - 1) // 2 <= min(HALO, MARGIN)

    # One row-block per TensorCore (v7x megacore) when the batch is big enough
    # to split; otherwise fold the whole batch into a single grid step.
    num_blocks = 2 if (N % 2 == 0 and N > 2) else 1
    NB = N // num_blocks
    PITCH = L + 2 * HALO          # even (L even, HALO even) -> parity trick OK
    R = NB * PITCH

    # Interior / even-interior row masks over the folded-batch logical rows.
    rows = jnp.arange(R)
    rel = rows % PITCH
    interior = (rel >= HALO) & (rel < HALO + L)
    imask = interior.astype(jnp.float32)[:, None]                    # (R, 1)
    eimask = (interior & (rows % 2 == 0)).astype(jnp.float32)[:, None]

    def prep_w(w):   # (Cout, Cin, K) -> (K, Cin, Cout), bf16 MXU operand
        return jnp.transpose(w, (2, 1, 0)).astype(jnp.bfloat16)

    def prep_b(b):   # (Cout,) -> (1, Cout), f32 epilogue
        return b.reshape(1, -1).astype(jnp.float32)

    def const_spec(shape):
        return pl.BlockSpec(shape, lambda g, _s=shape: (0,) * len(_s))

    kernel = functools.partial(_fused_forward_kernel, K=K, NB=NB, PITCH=PITCH,
                               HALO=HALO, MARGIN=MARGIN, L=L)

    # NOTE(v7x): weights/masks have constant index maps; at realistic DenseED
    # widths they could additionally be single-buffered (pl.Buffered(1)).
    out = pl.pallas_call(
        kernel,
        out_shape=jax.ShapeDtypeStruct((N, oC, L), jnp.float32),
        grid=(num_blocks,),
        in_specs=[
            pl.BlockSpec((NB, Cin, L), lambda g: (g, 0, 0)),   # x (per block)
            const_spec((R, 1)),                                # interior mask
            const_spec((R, 1)),                                # even-interior mask
            const_spec((K, Cin, H)), const_spec((1, H)),       # enc1
            const_spec((K, H, H2)), const_spec((1, H2)),       # enc2
            const_spec((K, H2, H)), const_spec((1, H)),        # dec1
            const_spec((K, H, oC)), const_spec((1, oC)),       # out
        ],
        out_specs=pl.BlockSpec((NB, oC, L), lambda g: (g, 0, 0)),
        scratch_shapes=[
            pltpu.VMEM((R + 2 * MARGIN, Cin), jnp.float32),    # staged input
            pltpu.VMEM((R + 2 * MARGIN, H), jnp.float32),      # staged h1 / h3
            pltpu.VMEM((R + 2 * MARGIN, H2), jnp.float32),     # staged h2_up
        ],
        compiler_params=pltpu.CompilerParams(
            dimension_semantics=("parallel",),                 # megacore on v7x
            vmem_limit_bytes=32 * 1024 * 1024),
    )(x.astype(jnp.float32), imask, eimask,
      prep_w(w1), prep_b(b1), prep_w(w2), prep_b(b2),
      prep_w(w3), prep_b(b3), prep_w(w4), prep_b(b4))

    return out                                                 # (N, oC, L)


# ----------------------------------------------------------------------------
# Deterministic parameter construction (synthetic; shapes follow a small
# DenseED-style 1D encoder-decoder).  No checkpoints are loaded.
# ----------------------------------------------------------------------------
def init_params(key, in_channels, out_channels, hidden=8):
    ks = jax.random.split(key, 8)

    def wb(kw, kb, cout, cin, k):
        scale = 1.0 / jnp.sqrt(cin * k)
        w = jax.random.normal(kw, (cout, cin, k), jnp.float32) * scale
        b = jax.random.normal(kb, (cout,), jnp.float32) * 0.01
        return w, b

    p = {}
    p["enc1"] = wb(ks[0], ks[1], hidden, in_channels, 3)       # stride 1 + relu
    p["enc2"] = wb(ks[2], ks[3], 2 * hidden, hidden, 3)        # stride 2 + relu
    p["dec1"] = wb(ks[4], ks[5], hidden, 2 * hidden, 3)        # after upsample
    p["out"] = wb(ks[6], ks[7], out_channels, hidden, 3)       # linear output
    return p


# ----------------------------------------------------------------------------
# Pure-jnp reference (same bf16-operand / f32-accumulate rounding as the
# kernel, no Pallas) for the correctness check.
# ----------------------------------------------------------------------------
def _conv1d_ref(x_ncl, w_oik, b_o, *, stride=1, relu=False):
    N, Cin, L = x_ncl.shape
    Cout, _, K = w_oik.shape
    pad = (K - 1) // 2
    xp = jnp.pad(x_ncl, ((0, 0), (0, 0), (pad, pad))).astype(jnp.bfloat16)
    wb = w_oik.astype(jnp.bfloat16)
    out = jnp.zeros((N, Cout, L), jnp.float32)
    for k in range(K):
        out = out + jnp.einsum("ncl,oc->nol", xp[:, :, k:k + L], wb[:, :, k],
                               preferred_element_type=jnp.float32)
    out = out + b_o[None, :, None].astype(jnp.float32)
    if relu:
        out = jnp.maximum(out, 0.0)
    if stride > 1:
        out = out[:, :, ::stride]
    return out


def _forward_ref(params, x):
    h = _conv1d_ref(x, *params["enc1"], stride=1, relu=True)
    h = _conv1d_ref(h, *params["enc2"], stride=2, relu=True)
    h = jnp.repeat(h, 2, axis=2)                               # nearest x2
    h = _conv1d_ref(h, *params["dec1"], stride=1, relu=True)
    return _conv1d_ref(h, *params["out"], stride=1, relu=False)


if __name__ == "__main__":
    # BayesNN.__init__ hyper-parameters (log_beta does NOT enter forward()).
    dt = 0.1
    c0, k0 = 0.2, 3.0
    beta_mean = 1.0 / (c0 * dt ** k0)
    beta_prior_shape = 10.0
    beta_prior_rate = beta_prior_shape / beta_mean
    # TODO(synk): PyTorch samples log_beta from a Gamma prior; use its mean
    # deterministically (the parameter is unused by forward()).
    log_beta = jnp.log(jnp.asarray(beta_prior_shape / beta_prior_rate,
                                   jnp.float32))

    key = jax.random.PRNGKey(0)
    k_param, k_x = jax.random.split(key)

    N, iC, iH = 2, 2, 16          # small 1D Burgers-style input: N x iC x iH
    oC = 2
    params = init_params(k_param, iC, oC, hidden=8)
    x = jax.random.normal(k_x, (N, iC, iH), jnp.float32)

    fwd = jax.jit(bayesnn_forward)
    y = jax.block_until_ready(fwd(params, x))
    y_ref = _forward_ref(params, x)

    assert y.shape == (N, oC, iH), y.shape
    assert jnp.allclose(y, y_ref, atol=2e-3, rtol=2e-3), "Pallas/ref mismatch"
    _ = float(jnp.exp(log_beta))  # BayesNN.beta()
    print("KERNEL_OK")
</pallas_src>

<mosaic_0001>
module attributes {stable_mosaic.version = 11 : i64} {
  func.func @_fused_forward_kernel(%arg0: i32, %arg1: memref<2x2x16xf32, #tpu.memory_space<vmem>>, %arg2: memref<64x1xf32, #tpu.memory_space<vmem>>, %arg3: memref<64x1xf32, #tpu.memory_space<vmem>>, %arg4: memref<3x2x8xbf16, #tpu.memory_space<vmem>>, %arg5: memref<1x8xf32, #tpu.memory_space<vmem>>, %arg6: memref<3x8x16xbf16, #tpu.memory_space<vmem>>, %arg7: memref<1x16xf32, #tpu.memory_space<vmem>>, %arg8: memref<3x16x8xbf16, #tpu.memory_space<vmem>>, %arg9: memref<1x8xf32, #tpu.memory_space<vmem>>, %arg10: memref<3x8x2xbf16, #tpu.memory_space<vmem>>, %arg11: memref<1x2xf32, #tpu.memory_space<vmem>>, %arg12: memref<2x2x16xf32, #tpu.memory_space<vmem>>, %arg13: memref<80x2xf32, #tpu.memory_space<vmem>>, %arg14: memref<80x8xf32, #tpu.memory_space<vmem>>, %arg15: memref<80x16xf32, #tpu.memory_space<vmem>>) attributes {dimension_semantics = [#tpu.dimension_semantics<parallel>], iteration_bounds = array<i64: 1>, scalar_prefetch = 0 : i64, scratch_operands = 3 : i64, tpu.core_type = #tpu.core_type<tc>, window_params = [{transform_indices = @transform_0, window_bounds = array<i64: 2, 2, 16>}, {pipeline_mode = #tpu.pipeline_mode<synchronous>, transform_indices = @transform_1, window_bounds = array<i64: 64, 1>}, {pipeline_mode = #tpu.pipeline_mode<synchronous>, transform_indices = @transform_2, window_bounds = array<i64: 64, 1>}, {pipeline_mode = #tpu.pipeline_mode<synchronous>, transform_indices = @transform_3, window_bounds = array<i64: 3, 2, 8>}, {pipeline_mode = #tpu.pipeline_mode<synchronous>, transform_indices = @transform_4, window_bounds = array<i64: 1, 8>}, {pipeline_mode = #tpu.pipeline_mode<synchronous>, transform_indices = @transform_5, window_bounds = array<i64: 3, 8, 16>}, {pipeline_mode = #tpu.pipeline_mode<synchronous>, transform_indices = @transform_6, window_bounds = array<i64: 1, 16>}, {pipeline_mode = #tpu.pipeline_mode<synchronous>, transform_indices = @transform_7, window_bounds = array<i64: 3, 16, 8>}, {pipeline_mode = #tpu.pipeline_mode<synchronous>, transform_indices = @transform_8, window_bounds = array<i64: 1, 8>}, {pipeline_mode = #tpu.pipeline_mode<synchronous>, transform_indices = @transform_9, window_bounds = array<i64: 3, 8, 2>}, {pipeline_mode = #tpu.pipeline_mode<synchronous>, transform_indices = @transform_10, window_bounds = array<i64: 1, 2>}, {transform_indices = @transform_11, window_bounds = array<i64: 2, 2, 16>}]} {
    %cst = arith.constant 0.000000e+00 : f32
    %0 = vector.broadcast %cst : f32 to vector<80x2xf32>
    %c0 = arith.constant 0 : index
    %c0_0 = arith.constant 0 : index
    %1 = vector.load %arg13[%c0, %c0_0] : memref<80x2xf32, #tpu.memory_space<vmem>>, vector<80x2xf32>
    tpu.vector_store %arg13[%c0, %c0_0], %0 {strides = array<i32>} : memref<80x2xf32, #tpu.memory_space<vmem>>, vector<80x2xf32>,
    %cst_1 = arith.constant 0.000000e+00 : f32
    %2 = vector.broadcast %cst_1 : f32 to vector<8x8xf32>
    %cst_2 = arith.constant 0.000000e+00 : f32
    %3 = vector.broadcast %cst_2 : f32 to vector<8x16xf32>
    %c0_3 = arith.constant 0 : index
    %c0_4 = arith.constant 0 : index
    %4 = vector.load %arg14[%c0_3, %c0_4] : memref<80x8xf32, #tpu.memory_space<vmem>>, vector<8x8xf32>
    tpu.vector_store %arg14[%c0_3, %c0_4], %2 {strides = array<i32>} : memref<80x8xf32, #tpu.memory_space<vmem>>, vector<8x8xf32>,
    %c72 = arith.constant 72 : index
    %c0_5 = arith.constant 0 : index
    %5 = vector.load %arg14[%c72, %c0_5] : memref<80x8xf32, #tpu.memory_space<vmem>>, vector<8x8xf32>
    tpu.vector_store %arg14[%c72, %c0_5], %2 {strides = array<i32>} : memref<80x8xf32, #tpu.memory_space<vmem>>, vector<8x8xf32>,
    %c0_6 = arith.constant 0 : index
    %c0_7 = arith.constant 0 : index
    %6 = vector.load %arg15[%c0_6, %c0_7] : memref<80x16xf32, #tpu.memory_space<vmem>>, vector<8x16xf32>
    tpu.vector_store %arg15[%c0_6, %c0_7], %3 {strides = array<i32>} : memref<80x16xf32, #tpu.memory_space<vmem>>, vector<8x16xf32>,
    %c72_8 = arith.constant 72 : index
    %c0_9 = arith.constant 0 : index
    %7 = vector.load %arg15[%c72_8, %c0_9] : memref<80x16xf32, #tpu.memory_space<vmem>>, vector<8x16xf32>
    tpu.vector_store %arg15[%c72_8, %c0_9], %3 {strides = array<i32>} : memref<80x16xf32, #tpu.memory_space<vmem>>, vector<8x16xf32>,
    %c0_10 = arith.constant 0 : index
    %c0_11 = arith.constant 0 : index
    %c0_12 = arith.constant 0 : index
    %8 = vector.load %arg1[%c0_10, %c0_11, %c0_12] : memref<2x2x16xf32, #tpu.memory_space<vmem>>, vector<1x2x16xf32>
    %9 = vector.shape_cast %8 : vector<1x2x16xf32> to vector<2x16xf32>
    %10 = tpu.transpose %9, [1, 0] : vector<2x16xf32> -> vector<16x2xf32>
    %c16 = arith.constant 16 : index
    %c0_13 = arith.constant 0 : index
    %11 = vector.load %arg13[%c16, %c0_13] : memref<80x2xf32, #tpu.memory_space<vmem>>, vector<16x2xf32>
    tpu.vector_store %arg13[%c16, %c0_13], %10 {strides = array<i32>} : memref<80x2xf32, #tpu.memory_space<vmem>>, vector<16x2xf32>,
    %c1 = arith.constant 1 : index
    %c0_14 = arith.constant 0 : index
    %c0_15 = arith.constant 0 : index
    %12 = vector.load %arg1[%c1, %c0_14, %c0_15] : memref<2x2x16xf32, #tpu.memory_space<vmem>>, vector<1x2x16xf32>
    %13 = vector.shape_cast %12 : vector<1x2x16xf32> to vector<2x16xf32>
    %14 = tpu.transpose %13, [1, 0] : vector<2x16xf32> -> vector<16x2xf32>
    %c48 = arith.constant 48 : index
    %c0_16 = arith.constant 0 : index
    %15 = vector.load %arg13[%c48, %c0_16] : memref<80x2xf32, #tpu.memory_space<vmem>>, vector<16x2xf32>
    tpu.vector_store %arg13[%c48, %c0_16], %14 {strides = array<i32>} : memref<80x2xf32, #tpu.memory_space<vmem>>, vector<16x2xf32>,
    %c0_17 = arith.constant 0 : index
    %c0_18 = arith.constant 0 : index
    %16 = vector.load %arg2[%c0_17, %c0_18] : memref<64x1xf32, #tpu.memory_space<vmem>>, vector<64x1xf32>
    %c0_19 = arith.constant 0 : index
    %c0_20 = arith.constant 0 : index
    %17 = vector.load %arg3[%c0_19, %c0_20] : memref<64x1xf32, #tpu.memory_space<vmem>>, vector<64x1xf32>
    %c7 = arith.constant 7 : index
    %c0_21 = arith.constant 0 : index
    %18 = vector.load %arg13[%c7, %c0_21] : memref<80x2xf32, #tpu.memory_space<vmem>>, vector<64x2xf32>
    %19 = arith.truncf %18 : vector<64x2xf32> to vector<64x2xbf16>
    %c0_22 = arith.constant 0 : index
    %c0_23 = arith.constant 0 : index
    %c0_24 = arith.constant 0 : index
    %20 = vector.load %arg4[%c0_22, %c0_23, %c0_24] : memref<3x2x8xbf16, #tpu.memory_space<vmem>>, vector<1x2x8xbf16>
    %21 = vector.shape_cast %20 : vector<1x2x8xbf16> to vector<2x8xbf16>
    %cst_25 = arith.constant dense<0.000000e+00> : vector<64x8xf32>
    %22 = tpu.matmul %19, %21, %cst_25 {dimension_numbers = #tpu.dot_dimension_numbers<[1], [0], [0], [1], [0, 0, 1, 1], [], []>} : vector<64x2xbf16>, vector<2x8xbf16>, vector<64x8xf32> -> vector<64x8xf32>
    %c8 = arith.constant 8 : index
    %c0_26 = arith.constant 0 : index
    %23 = vector.load %arg13[%c8, %c0_26] : memref<80x2xf32, #tpu.memory_space<vmem>>, vector<64x2xf32>
    %24 = arith.truncf %23 : vector<64x2xf32> to vector<64x2xbf16>
    %c1_27 = arith.constant 1 : index
    %c0_28 = arith.constant 0 : index
    %c0_29 = arith.constant 0 : index
    %25 = vector.load %arg4[%c1_27, %c0_28, %c0_29] : memref<3x2x8xbf16, #tpu.memory_space<vmem>>, vector<1x2x8xbf16>
    %26 = vector.shape_cast %25 : vector<1x2x8xbf16> to vector<2x8xbf16>
    %cst_30 = arith.constant dense<0.000000e+00> : vector<64x8xf32>
    %27 = tpu.matmul %24, %26, %cst_30 {dimension_numbers = #tpu.dot_dimension_numbers<[1], [0], [0], [1], [0, 0, 1, 1], [], []>} : vector<64x2xbf16>, vector<2x8xbf16>, vector<64x8xf32> -> vector<64x8xf32>
    %28 = arith.addf %22, %27 : vector<64x8xf32>
    %c9 = arith.constant 9 : index
    %c0_31 = arith.constant 0 : index
    %29 = vector.load %arg13[%c9, %c0_31] : memref<80x2xf32, #tpu.memory_space<vmem>>, vector<64x2xf32>
    %30 = arith.truncf %29 : vector<64x2xf32> to vector<64x2xbf16>
    %c2 = arith.constant 2 : index
    %c0_32 = arith.constant 0 : index
    %c0_33 = arith.constant 0 : index
    %31 = vector.load %arg4[%c2, %c0_32, %c0_33] : memref<3x2x8xbf16, #tpu.memory_space<vmem>>, vector<1x2x8xbf16>
    %32 = vector.shape_cast %31 : vector<1x2x8xbf16> to vector<2x8xbf16>
    %cst_34 = arith.constant dense<0.000000e+00> : vector<64x8xf32>
    %33 = tpu.matmul %30, %32, %cst_34 {dimension_numbers = #tpu.dot_dimension_numbers<[1], [0], [0], [1], [0, 0, 1, 1], [], []>} : vector<64x2xbf16>, vector<2x8xbf16>, vector<64x8xf32> -> vector<64x8xf32>
    %34 = arith.addf %28, %33 : vector<64x8xf32>
    %c0_35 = arith.constant 0 : index
    %c0_36 = arith.constant 0 : index
    %35 = vector.load %arg5[%c0_35, %c0_36] : memref<1x8xf32, #tpu.memory_space<vmem>>, vector<1x8xf32>
    %36 = vector.broadcast %35 : vector<1x8xf32> to vector<64x8xf32>
    %37 = arith.addf %34, %36 : vector<64x8xf32>
    %cst_37 = arith.constant 0.000000e+00 : f32
    %38 = vector.broadcast %cst_37 : f32 to vector<64x8xf32>
    %39 = arith.maximumf %37, %38 : vector<64x8xf32>
    %40 = vector.broadcast %16 : vector<64x1xf32> to vector<64x8xf32>
    %41 = arith.mulf %39, %40 : vector<64x8xf32>
    %c8_38 = arith.constant 8 : index
    %c0_39 = arith.constant 0 : index
    %42 = vector.load %arg14[%c8_38, %c0_39] : memref<80x8xf32, #tpu.memory_space<vmem>>, vector<64x8xf32>
    tpu.vector_store %arg14[%c8_38, %c0_39], %41 {strides = array<i32>} : memref<80x8xf32, #tpu.memory_space<vmem>>, vector<64x8xf32>,
    %c7_40 = arith.constant 7 : index
    %c0_41 = arith.constant 0 : index
    %43 = vector.load %arg14[%c7_40, %c0_41] : memref<80x8xf32, #tpu.memory_space<vmem>>, vector<64x8xf32>
    %44 = arith.truncf %43 : vector<64x8xf32> to vector<64x8xbf16>
    %c0_42 = arith.constant 0 : index
    %c0_43 = arith.constant 0 : index
    %c0_44 = arith.constant 0 : index
    %45 = vector.load %arg6[%c0_42, %c0_43, %c0_44] : memref<3x8x16xbf16, #tpu.memory_space<vmem>>, vector<1x8x16xbf16>
    %46 = vector.shape_cast %45 : vector<1x8x16xbf16> to vector<8x16xbf16>
    %cst_45 = arith.constant dense<0.000000e+00> : vector<64x16xf32>
    %47 = tpu.matmul %44, %46, %cst_45 {dimension_numbers = #tpu.dot_dimension_numbers<[1], [0], [0], [1], [0, 0, 1, 1], [], []>} : vector<64x8xbf16>, vector<8x16xbf16>, vector<64x16xf32> -> vector<64x16xf32>
    %c8_46 = arith.constant 8 : index
    %c0_47 = arith.constant 0 : index
    %48 = vector.load %arg14[%c8_46, %c0_47] : memref<80x8xf32, #tpu.memory_space<vmem>>, vector<64x8xf32>
    %49 = arith.truncf %48 : vector<64x8xf32> to vector<64x8xbf16>
    %c1_48 = arith.constant 1 : index
    %c0_49 = arith.constant 0 : index
    %c0_50 = arith.constant 0 : index
    %50 = vector.load %arg6[%c1_48, %c0_49, %c0_50] : memref<3x8x16xbf16, #tpu.memory_space<vmem>>, vector<1x8x16xbf16>
    %51 = vector.shape_cast %50 : vector<1x8x16xbf16> to vector<8x16xbf16>
    %cst_51 = arith.constant dense<0.000000e+00> : vector<64x16xf32>
    %52 = tpu.matmul %49, %51, %cst_51 {dimension_numbers = #tpu.dot_dimension_numbers<[1], [0], [0], [1], [0, 0, 1, 1], [], []>} : vector<64x8xbf16>, vector<8x16xbf16>, vector<64x16xf32> -> vector<64x16xf32>
    %53 = arith.addf %47, %52 : vector<64x16xf32>
    %c9_52 = arith.constant 9 : index
    %c0_53 = arith.constant 0 : index
    %54 = vector.load %arg14[%c9_52, %c0_53] : memref<80x8xf32, #tpu.memory_space<vmem>>, vector<64x8xf32>
    %55 = arith.truncf %54 : vector<64x8xf32> to vector<64x8xbf16>
    %c2_54 = arith.constant 2 : index
    %c0_55 = arith.constant 0 : index
    %c0_56 = arith.constant 0 : index
    %56 = vector.load %arg6[%c2_54, %c0_55, %c0_56] : memref<3x8x16xbf16, #tpu.memory_space<vmem>>, vector<1x8x16xbf16>
    %57 = vector.shape_cast %56 : vector<1x8x16xbf16> to vector<8x16xbf16>
    %cst_57 = arith.constant dense<0.000000e+00> : vector<64x16xf32>
    %58 = tpu.matmul %55, %57, %cst_57 {dimension_numbers = #tpu.dot_dimension_numbers<[1], [0], [0], [1], [0, 0, 1, 1], [], []>} : vector<64x8xbf16>, vector<8x16xbf16>, vector<64x16xf32> -> vector<64x16xf32>
    %59 = arith.addf %53, %58 : vector<64x16xf32>
    %c0_58 = arith.constant 0 : index
    %c0_59 = arith.constant 0 : index
    %60 = vector.load %arg7[%c0_58, %c0_59] : memref<1x16xf32, #tpu.memory_space<vmem>>, vector<1x16xf32>
    %61 = vector.broadcast %60 : vector<1x16xf32> to vector<64x16xf32>
    %62 = arith.addf %59, %61 : vector<64x16xf32>
    %cst_60 = arith.constant 0.000000e+00 : f32
    %63 = vector.broadcast %cst_60 : f32 to vector<64x16xf32>
    %64 = arith.maximumf %62, %63 : vector<64x16xf32>
    %65 = vector.broadcast %17 : vector<64x1xf32> to vector<64x16xf32>
    %66 = arith.mulf %64, %65 : vector<64x16xf32>
    %c8_61 = arith.constant 8 : index
    %c0_62 = arith.constant 0 : index
    %67 = vector.load %arg15[%c8_61, %c0_62] : memref<80x16xf32, #tpu.memory_space<vmem>>, vector<64x16xf32>
    tpu.vector_store %arg15[%c8_61, %c0_62], %66 {strides = array<i32>} : memref<80x16xf32, #tpu.memory_space<vmem>>, vector<64x16xf32>,
    %c7_63 = arith.constant 7 : index
    %c0_64 = arith.constant 0 : index
    %68 = vector.load %arg15[%c7_63, %c0_64] : memref<80x16xf32, #tpu.memory_space<vmem>>, vector<64x16xf32>
    %69 = arith.addf %66, %68 : vector<64x16xf32>
    %70 = vector.broadcast %16 : vector<64x1xf32> to vector<64x16xf32>
    %71 = arith.mulf %69, %70 : vector<64x16xf32>
    %c8_65 = arith.constant 8 : index
    %c0_66 = arith.constant 0 : index
    %72 = vector.load %arg15[%c8_65, %c0_66] : memref<80x16xf32, #tpu.memory_space<vmem>>, vector<64x16xf32>
    tpu.vector_store %arg15[%c8_65, %c0_66], %71 {strides = array<i32>} : memref<80x16xf32, #tpu.memory_space<vmem>>, vector<64x16xf32>,
    %c7_67 = arith.constant 7 : index
    %c0_68 = arith.constant 0 : index
    %73 = vector.load %arg15[%c7_67, %c0_68] : memref<80x16xf32, #tpu.memory_space<vmem>>, vector<64x16xf32>
    %74 = arith.truncf %73 : vector<64x16xf32> to vector<64x16xbf16>
    %c0_69 = arith.constant 0 : index
    %c0_70 = arith.constant 0 : index
    %c0_71 = arith.constant 0 : index
    %75 = vector.load %arg8[%c0_69, %c0_70, %c0_71] : memref<3x16x8xbf16, #tpu.memory_space<vmem>>, vector<1x16x8xbf16>
    %76 = vector.shape_cast %75 : vector<1x16x8xbf16> to vector<16x8xbf16>
    %cst_72 = arith.constant dense<0.000000e+00> : vector<64x8xf32>
    %77 = tpu.matmul %74, %76, %cst_72 {dimension_numbers = #tpu.dot_dimension_numbers<[1], [0], [0], [1], [0, 0, 1, 1], [], []>} : vector<64x16xbf16>, vector<16x8xbf16>, vector<64x8xf32> -> vector<64x8xf32>
    %c8_73 = arith.constant 8 : index
    %c0_74 = arith.constant 0 : index
    %78 = vector.load %arg15[%c8_73, %c0_74] : memref<80x16xf32, #tpu.memory_space<vmem>>, vector<64x16xf32>
    %79 = arith.truncf %78 : vector<64x16xf32> to vector<64x16xbf16>
    %c1_75 = arith.constant 1 : index
    %c0_76 = arith.constant 0 : index
    %c0_77 = arith.constant 0 : index
    %80 = vector.load %arg8[%c1_75, %c0_76, %c0_77] : memref<3x16x8xbf16, #tpu.memory_space<vmem>>, vector<1x16x8xbf16>
    %81 = vector.shape_cast %80 : vector<1x16x8xbf16> to vector<16x8xbf16>
    %cst_78 = arith.constant dense<0.000000e+00> : vector<64x8xf32>
    %82 = tpu.matmul %79, %81, %cst_78 {dimension_numbers = #tpu.dot_dimension_numbers<[1], [0], [0], [1], [0, 0, 1, 1], [], []>} : vector<64x16xbf16>, vector<16x8xbf16>, vector<64x8xf32> -> vector<64x8xf32>
    %83 = arith.addf %77, %82 : vector<64x8xf32>
    %c9_79 = arith.constant 9 : index
    %c0_80 = arith.constant 0 : index
    %84 = vector.load %arg15[%c9_79, %c0_80] : memref<80x16xf32, #tpu.memory_space<vmem>>, vector<64x16xf32>
    %85 = arith.truncf %84 : vector<64x16xf32> to vector<64x16xbf16>
    %c2_81 = arith.constant 2 : index
    %c0_82 = arith.constant 0 : index
    %c0_83 = arith.constant 0 : index
    %86 = vector.load %arg8[%c2_81, %c0_82, %c0_83] : memref<3x16x8xbf16, #tpu.memory_space<vmem>>, vector<1x16x8xbf16>
    %87 = vector.shape_cast %86 : vector<1x16x8xbf16> to vector<16x8xbf16>
    %cst_84 = arith.constant dense<0.000000e+00> : vector<64x8xf32>
    %88 = tpu.matmul %85, %87, %cst_84 {dimension_numbers = #tpu.dot_dimension_numbers<[1], [0], [0], [1], [0, 0, 1, 1], [], []>} : vector<64x16xbf16>, vector<16x8xbf16>, vector<64x8xf32> -> vector<64x8xf32>
    %89 = arith.addf %83, %88 : vector<64x8xf32>
    %c0_85 = arith.constant 0 : index
    %c0_86 = arith.constant 0 : index
    %90 = vector.load %arg9[%c0_85, %c0_86] : memref<1x8xf32, #tpu.memory_space<vmem>>, vector<1x8xf32>
    %91 = vector.broadcast %90 : vector<1x8xf32> to vector<64x8xf32>
    %92 = arith.addf %89, %91 : vector<64x8xf32>
    %cst_87 = arith.constant 0.000000e+00 : f32
    %93 = vector.broadcast %cst_87 : f32 to vector<64x8xf32>
    %94 = arith.maximumf %92, %93 : vector<64x8xf32>
    %95 = vector.broadcast %16 : vector<64x1xf32> to vector<64x8xf32>
    %96 = arith.mulf %94, %95 : vector<64x8xf32>
    %c8_88 = arith.constant 8 : index
    %c0_89 = arith.constant 0 : index
    %97 = vector.load %arg14[%c8_88, %c0_89] : memref<80x8xf32, #tpu.memory_space<vmem>>, vector<64x8xf32>
    tpu.vector_store %arg14[%c8_88, %c0_89], %96 {strides = array<i32>} : memref<80x8xf32, #tpu.memory_space<vmem>>, vector<64x8xf32>,
    %c7_90 = arith.constant 7 : index
    %c0_91 = arith.constant 0 : index
    %98 = vector.load %arg14[%c7_90, %c0_91] : memref<80x8xf32, #tpu.memory_space<vmem>>, vector<64x8xf32>
    %99 = arith.truncf %98 : vector<64x8xf32> to vector<64x8xbf16>
    %c0_92 = arith.constant 0 : index
    %c0_93 = arith.constant 0 : index
    %c0_94 = arith.constant 0 : index
    %100 = vector.load %arg10[%c0_92, %c0_93, %c0_94] : memref<3x8x2xbf16, #tpu.memory_space<vmem>>, vector<1x8x2xbf16>
    %101 = vector.shape_cast %100 : vector<1x8x2xbf16> to vector<8x2xbf16>
    %cst_95 = arith.constant dense<0.000000e+00> : vector<64x2xf32>
    %102 = tpu.matmul %99, %101, %cst_95 {dimension_numbers = #tpu.dot_dimension_numbers<[1], [0], [0], [1], [0, 0, 1, 1], [], []>} : vector<64x8xbf16>, vector<8x2xbf16>, vector<64x2xf32> -> vector<64x2xf32>
    %c8_96 = arith.constant 8 : index
    %c0_97 = arith.constant 0 : index
    %103 = vector.load %arg14[%c8_96, %c0_97] : memref<80x8xf32, #tpu.memory_space<vmem>>, vector<64x8xf32>
    %104 = arith.truncf %103 : vector<64x8xf32> to vector<64x8xbf16>
    %c1_98 = arith.constant 1 : index
    %c0_99 = arith.constant 0 : index
    %c0_100 = arith.constant 0 : index
    %105 = vector.load %arg10[%c1_98, %c0_99, %c0_100] : memref<3x8x2xbf16, #tpu.memory_space<vmem>>, vector<1x8x2xbf16>
    %106 = vector.shape_cast %105 : vector<1x8x2xbf16> to vector<8x2xbf16>
    %cst_101 = arith.constant dense<0.000000e+00> : vector<64x2xf32>
    %107 = tpu.matmul %104, %106, %cst_101 {dimension_numbers = #tpu.dot_dimension_numbers<[1], [0], [0], [1], [0, 0, 1, 1], [], []>} : vector<64x8xbf16>, vector<8x2xbf16>, vector<64x2xf32> -> vector<64x2xf32>
    %108 = arith.addf %102, %107 : vector<64x2xf32>
    %c9_102 = arith.constant 9 : index
    %c0_103 = arith.constant 0 : index
    %109 = vector.load %arg14[%c9_102, %c0_103] : memref<80x8xf32, #tpu.memory_space<vmem>>, vector<64x8xf32>
    %110 = arith.truncf %109 : vector<64x8xf32> to vector<64x8xbf16>
    %c2_104 = arith.constant 2 : index
    %c0_105 = arith.constant 0 : index
    %c0_106 = arith.constant 0 : index
    %111 = vector.load %arg10[%c2_104, %c0_105, %c0_106] : memref<3x8x2xbf16, #tpu.memory_space<vmem>>, vector<1x8x2xbf16>
    %112 = vector.shape_cast %111 : vector<1x8x2xbf16> to vector<8x2xbf16>
    %cst_107 = arith.constant dense<0.000000e+00> : vector<64x2xf32>
    %113 = tpu.matmul %110, %112, %cst_107 {dimension_numbers = #tpu.dot_dimension_numbers<[1], [0], [0], [1], [0, 0, 1, 1], [], []>} : vector<64x8xbf16>, vector<8x2xbf16>, vector<64x2xf32> -> vector<64x2xf32>
    %114 = arith.addf %108, %113 : vector<64x2xf32>
    %c0_108 = arith.constant 0 : index
    %c0_109 = arith.constant 0 : index
    %115 = vector.load %arg11[%c0_108, %c0_109] : memref<1x2xf32, #tpu.memory_space<vmem>>, vector<1x2xf32>
    %116 = vector.broadcast %115 : vector<1x2xf32> to vector<64x2xf32>
    %117 = arith.addf %114, %116 : vector<64x2xf32>
    %118 = vector.extract_strided_slice %117 {offsets = [8, 0], sizes = [16, 2], strides = [1, 1]} : vector<64x2xf32> to vector<16x2xf32>
    %119 = tpu.transpose %118, [1, 0] : vector<16x2xf32> -> vector<2x16xf32>
    %c0_110 = arith.constant 0 : index
    %c0_111 = arith.constant 0 : index
    %c0_112 = arith.constant 0 : index
    %120 = vector.load %arg12[%c0_110, %c0_111, %c0_112] : memref<2x2x16xf32, #tpu.memory_space<vmem>>, vector<1x2x16xf32>
    %121 = vector.shape_cast %120 : vector<1x2x16xf32> to vector<2x16xf32>
    %122 = vector.shape_cast %119 : vector<2x16xf32> to vector<1x2x16xf32>
    tpu.vector_store %arg12[%c0_110, %c0_111, %c0_112], %122 {strides = array<i32>} : memref<2x2x16xf32, #tpu.memory_space<vmem>>, vector<1x2x16xf32>,
    %123 = vector.extract_strided_slice %117 {offsets = [40, 0], sizes = [16, 2], strides = [1, 1]} : vector<64x2xf32> to vector<16x2xf32>
    %124 = tpu.transpose %123, [1, 0] : vector<16x2xf32> -> vector<2x16xf32>
    %c1_113 = arith.constant 1 : index
    %c0_114 = arith.constant 0 : index
    %c0_115 = arith.constant 0 : index
    %125 = vector.load %arg12[%c1_113, %c0_114, %c0_115] : memref<2x2x16xf32, #tpu.memory_space<vmem>>, vector<1x2x16xf32>
    %126 = vector.shape_cast %125 : vector<1x2x16xf32> to vector<2x16xf32>
    %127 = vector.shape_cast %124 : vector<2x16xf32> to vector<1x2x16xf32>
    tpu.vector_store %arg12[%c1_113, %c0_114, %c0_115], %127 {strides = array<i32>} : memref<2x2x16xf32, #tpu.memory_space<vmem>>, vector<1x2x16xf32>,
    return
  }
  func.func @transform_0(%arg0: i32) -> (i32, i32, i32) {
    %c0_i32 = arith.constant 0 : i32
    %c0_i32_0 = arith.constant 0 : i32
    %c0_i32_1 = arith.constant 0 : i32
    return %arg0, %c0_i32, %c0_i32_0 : i32, i32, i32
  }
  func.func @transform_1(%arg0: i32) -> (i32, i32) {
    %c0_i32 = arith.constant 0 : i32
    %c0_i32_0 = arith.constant 0 : i32
    %c0_i32_1 = arith.constant 0 : i32
    return %c0_i32, %c0_i32_0 : i32, i32
  }
  func.func @transform_2(%arg0: i32) -> (i32, i32) {
    %c0_i32 = arith.constant 0 : i32
    %c0_i32_0 = arith.constant 0 : i32
    %c0_i32_1 = arith.constant 0 : i32
    return %c0_i32, %c0_i32_0 : i32, i32
  }
  func.func @transform_3(%arg0: i32) -> (i32, i32, i32) {
    %c0_i32 = arith.constant 0 : i32
    %c0_i32_0 = arith.constant 0 : i32
    %c0_i32_1 = arith.constant 0 : i32
    %c0_i32_2 = arith.constant 0 : i32
    return %c0_i32, %c0_i32_0, %c0_i32_1 : i32, i32, i32
  }
  func.func @transform_4(%arg0: i32) -> (i32, i32) {
    %c0_i32 = arith.constant 0 : i32
    %c0_i32_0 = arith.constant 0 : i32
    %c0_i32_1 = arith.constant 0 : i32
    return %c0_i32, %c0_i32_0 : i32, i32
  }
  func.func @transform_5(%arg0: i32) -> (i32, i32, i32) {
    %c0_i32 = arith.constant 0 : i32
    %c0_i32_0 = arith.constant 0 : i32
    %c0_i32_1 = arith.constant 0 : i32
    %c0_i32_2 = arith.constant 0 : i32
    return %c0_i32, %c0_i32_0, %c0_i32_1 : i32, i32, i32
  }
  func.func @transform_6(%arg0: i32) -> (i32, i32) {
    %c0_i32 = arith.constant 0 : i32
    %c0_i32_0 = arith.constant 0 : i32
    %c0_i32_1 = arith.constant 0 : i32
    return %c0_i32, %c0_i32_0 : i32, i32
  }
  func.func @transform_7(%arg0: i32) -> (i32, i32, i32) {
    %c0_i32 = arith.constant 0 : i32
    %c0_i32_0 = arith.constant 0 : i32
    %c0_i32_1 = arith.constant 0 : i32
    %c0_i32_2 = arith.constant 0 : i32
    return %c0_i32, %c0_i32_0, %c0_i32_1 : i32, i32, i32
  }
  func.func @transform_8(%arg0: i32) -> (i32, i32) {
    %c0_i32 = arith.constant 0 : i32
    %c0_i32_0 = arith.constant 0 : i32
    %c0_i32_1 = arith.constant 0 : i32
    return %c0_i32, %c0_i32_0 : i32, i32
  }
  func.func @transform_9(%arg0: i32) -> (i32, i32, i32) {
    %c0_i32 = arith.constant 0 : i32
    %c0_i32_0 = arith.constant 0 : i32
    %c0_i32_1 = arith.constant 0 : i32
    %c0_i32_2 = arith.constant 0 : i32
    return %c0_i32, %c0_i32_0, %c0_i32_1 : i32, i32, i32
  }
  func.func @transform_10(%arg0: i32) -> (i32, i32) {
    %c0_i32 = arith.constant 0 : i32
    %c0_i32_0 = arith.constant 0 : i32
    %c0_i32_1 = arith.constant 0 : i32
    return %c0_i32, %c0_i32_0 : i32, i32
  }
  func.func @transform_11(%arg0: i32) -> (i32, i32, i32) {
    %c0_i32 = arith.constant 0 : i32
    %c0_i32_0 = arith.constant 0 : i32
    %c0_i32_1 = arith.constant 0 : i32
    return %arg0, %c0_i32, %c0_i32_0 : i32, i32, i32
  }
}

</mosaic_0001>

<llo_original>
// kernel: bayesnn_forward.1
$region0: #{bayesnn_forward.1}
  #allocation0 [shape = 'u32[]', space=smem, size = 0x4, offset = 0x4, fixed_abs, tag = 'smem constant byte address 0x4 - core index']
  #allocation1 [shape = 'u32[144,128]{1,0:T(1,128)}', space=vmem, size = 0x12000, scoped, tag = 'internal scratch']
  #allocation2 [shape = 'f32[80,2]{1,0:T(8,128)}', space=vmem, size = 0xa000, scoped, tag = 'scratch operand']
  #allocation3 [shape = 'f32[80,8]{1,0:T(8,128)}', space=vmem, size = 0xa000, scoped, tag = 'scratch operand']
  #allocation4 [shape = 'f32[80,16]{1,0:T(8,128)}', space=vmem, size = 0xa000, scoped, tag = 'scratch operand']
  %s0 = inlined_call_operand.vmem [shape: f32[2,2,16], index: 0, kind: input, shape index: {}]
  %s1 = inlined_call_operand.vmem [shape: f32[64,1], index: 1, kind: input, shape index: {}]
  %s2 = inlined_call_operand.vmem [shape: f32[64,1], index: 2, kind: input, shape index: {}]
  %s3 = inlined_call_operand.vmem [shape: bf16[3,2,8], index: 3, kind: input, shape index: {}]
  %s4 = inlined_call_operand.vmem [shape: f32[1,8], index: 4, kind: input, shape index: {}]
  %s5 = inlined_call_operand.vmem [shape: bf16[3,8,16], index: 5, kind: input, shape index: {}]
  %s6 = inlined_call_operand.vmem [shape: f32[1,16], index: 6, kind: input, shape index: {}]
  %s7 = inlined_call_operand.vmem [shape: bf16[3,16,8], index: 7, kind: input, shape index: {}]
  %s8 = inlined_call_operand.vmem [shape: f32[1,8], index: 8, kind: input, shape index: {}]
  %s9 = inlined_call_operand.vmem [shape: bf16[3,8,2], index: 9, kind: input, shape index: {}]
  %s10 = inlined_call_operand.vmem [shape: f32[1,2], index: 10, kind: input, shape index: {}]
  %s11 = inlined_call_operand.hbm [shape: f32[2,2,16], index: 11, kind: output, shape index: {}]
  %s12 = sld [smem:[#allocation0]]
  $region54: #{bayesnn_forward.1} parent=0
    _
  %s14 = ssub.s32 1, %s12
  %s15 = scalar_select 0, %s14, %s12
  $region1: #{bayesnn_forward.1} parent=0
    #allocation5 [shape = 'u8[2048]{0}', space=vmem, size = 0x800, scoped, tag = 'output window, operand 0, single buffered']
    #allocation6 [shape = 's32[1]{0}', space=sflag, size = 0x4, scoped, tag = 'scoped memory for bayesnn_forward.1']
    %16 = vsyncpa [#allocation6], 0
    // Predicated region
    $region2: #{bayesnn_forward.1} parent=1 // pred_check
      _
    $region3: #{bayesnn_forward.1} parent=1 // pred_check_branch
      %18 = sbr.rel (0) target = $region5
    $region4: #{bayesnn_forward.1} parent=1 // pred_region
      _
    $region5: #{bayesnn_forward.1} parent=1 // pred_fallthru
      _
    // Predicated region
    $region6: #{bayesnn_forward.1} parent=1 // pred_check
      _
    $region7: #{bayesnn_forward.1} parent=1 // pred_check_branch
      %20 = sbr.rel (0) target = $region9
    $region8: #{bayesnn_forward.1} parent=1 // pred_region
      _
    $region9: #{bayesnn_forward.1} parent=1 // pred_fallthru
      _
    // Predicated region
    $region10: #{bayesnn_forward.1} parent=1 // pred_check
      _
    $region11: #{bayesnn_forward.1} parent=1 // pred_check_branch
      %22 = sbr.rel (0) target = $region13
    $region12: #{bayesnn_forward.1} parent=1 // pred_region
      _
    $region13: #{bayesnn_forward.1} parent=1 // pred_fallthru
      _
    // Predicated region
    $region14: #{bayesnn_forward.1} parent=1 // pred_check
      _
    $region15: #{bayesnn_forward.1} parent=1 // pred_check_branch
      %24 = sbr.rel (0) target = $region17
    $region16: #{bayesnn_forward.1} parent=1 // pred_region
      _
    $region17: #{bayesnn_forward.1} parent=1 // pred_fallthru
      _
    // Predicated region
    $region18: #{bayesnn_forward.1} parent=1 // pred_check
      _
    $region19: #{bayesnn_forward.1} parent=1 // pred_check_branch
      %26 = sbr.rel (0) target = $region21
    $region20: #{bayesnn_forward.1} parent=1 // pred_region
      _
    $region21: #{bayesnn_forward.1} parent=1 // pred_fallthru
      _
    // Predicated region
    $region22: #{bayesnn_forward.1} parent=1 // pred_check
      _
    $region23: #{bayesnn_forward.1} parent=1 // pred_check_branch
      %28 = sbr.rel (0) target = $region25
    $region24: #{bayesnn_forward.1} parent=1 // pred_region
      _
    $region25: #{bayesnn_forward.1} parent=1 // pred_fallthru
      _
    // Predicated region
    $region26: #{bayesnn_forward.1} parent=1 // pred_check
      _
    $region27: #{bayesnn_forward.1} parent=1 // pred_check_branch
      %30 = sbr.rel (0) target = $region29
    $region28: #{bayesnn_forward.1} parent=1 // pred_region
      _
    $region29: #{bayesnn_forward.1} parent=1 // pred_fallthru
      _
    // Predicated region
    $region30: #{bayesnn_forward.1} parent=1 // pred_check
      _
    $region31: #{bayesnn_forward.1} parent=1 // pred_check_branch
      %32 = sbr.rel (0) target = $region33
    $region32: #{bayesnn_forward.1} parent=1 // pred_region
      _
    $region33: #{bayesnn_forward.1} parent=1 // pred_fallthru
      _
    // Predicated region
    $region34: #{bayesnn_forward.1} parent=1 // pred_check
      _
    $region35: #{bayesnn_forward.1} parent=1 // pred_check_branch
      %34 = sbr.rel (0) target = $region37
    $region36: #{bayesnn_forward.1} parent=1 // pred_region
      _
    $region37: #{bayesnn_forward.1} parent=1 // pred_fallthru
      _
    // Predicated region
    $region38: #{bayesnn_forward.1} parent=1 // pred_check
      _
    $region39: #{bayesnn_forward.1} parent=1 // pred_check_branch
      %36 = sbr.rel (0) target = $region41
    $region40: #{bayesnn_forward.1} parent=1 // pred_region
      _
    $region41: #{bayesnn_forward.1} parent=1 // pred_fallthru
      _
    // Predicated region
    $region42: #{bayesnn_forward.1} parent=1 // pred_check
      _
    $region43: #{bayesnn_forward.1} parent=1 // pred_check_branch
      %38 = sbr.rel (0) target = $region45
    $region44: #{bayesnn_forward.1} parent=1 // pred_region
      _
    $region45: #{bayesnn_forward.1} parent=1 // pred_fallthru
      _
    %vm40 = vcmask 15360
    %41 = vst.msk [vmem:[#allocation2] sm:$0xff] %vm40, 0.0
    %42 = vst.msk [vmem:[#allocation2 + $0x8] sm:$0xff] %vm40, 0.0
    %43 = vst.msk [vmem:[#allocation2 + $0x10] sm:$0xff] %vm40, 0.0
    %44 = vst.msk [vmem:[#allocation2 + $0x18] sm:$0xff] %vm40, 0.0
    %45 = vst.msk [vmem:[#allocation2 + $0x20] sm:$0xff] %vm40, 0.0
    %46 = vst.msk [vmem:[#allocation2 + $0x28] sm:$0xff] %vm40, 0.0
    %47 = vst.msk [vmem:[#allocation2 + $0x30] sm:$0xff] %vm40, 0.0
    %48 = vst.msk [vmem:[#allocation2 + $0x38] sm:$0xff] %vm40, 0.0
    %49 = vst.msk [vmem:[#allocation2 + $0x40] sm:$0xff] %vm40, 0.0
    %50 = vst.msk [vmem:[#allocation2 + $0x48] sm:$0xff] %vm40, 0.0
    %vm51 = vcmask 64512
    %52 = vst.msk [vmem:[#allocation3] sm:$0xff] %vm51, 0.0
    %53 = vst.msk [vmem:[#allocation3 + $0x48] sm:$0xff] %vm51, 0.0
    %vm54 = vcmask 130048
    %55 = vst.msk [vmem:[#allocation4] sm:$0xff] %vm54, 0.0
    %56 = vst.msk [vmem:[#allocation4 + $0x48] sm:$0xff] %vm54, 0.0
    %v57 = vld [vmem:[%s0] sm:$0x3]
    %58 = vxpose.xlu0.b32.start [1/16] %v57, 128
    %59 = vxpose.xlu0.b32.cont [2/16] 0.0, 128
    %60 = vxpose.xlu0.b32.cont [3/16] 0.0, 128
    %61 = vxpose.xlu0.b32.cont [4/16] 0.0, 128
    %62 = vxpose.xlu0.b32.cont [5/16] 0.0, 128
    %63 = vxpose.xlu0.b32.cont [6/16] 0.0, 128
    %64 = vxpose.xlu0.b32.cont [7/16] 0.0, 128
    %65 = vxpose.xlu0.b32.cont [8/16] 0.0, 128
    %66 = vxpose.xlu0.b32.cont [9/16] 0.0, 128
    %67 = vxpose.xlu0.b32.cont [10/16] 0.0, 128
    %68 = vxpose.xlu0.b32.cont [11/16] 0.0, 128
    %69 = vxpose.xlu0.b32.cont [12/16] 0.0, 128
    %70 = vxpose.xlu0.b32.cont [13/16] 0.0, 128
    %71 = vxpose.xlu0.b32.cont [14/16] 0.0, 128
    %72 = vxpose.xlu0.b32.cont [15/16] 0.0, 128
    %73 = vxpose.xlu0.b32.end [16/16] 0.0, 128
    %v74 = vpop.trf.xlu0
    %v75 = vpop.trf.xlu0
    %v76 = vpop.trf.xlu0
    %v77 = vpop.trf.xlu0
    %v78 = vpop.trf.xlu0
    %v79 = vpop.trf.xlu0
    %v80 = vpop.trf.xlu0
    %v81 = vpop.trf.xlu0
    %v82 = vpop.trf.xlu0
    %v83 = vpop.trf.xlu0
    %v84 = vpop.trf.xlu0
    %v85 = vpop.trf.xlu0
    %v86 = vpop.trf.xlu0
    %v87 = vpop.trf.xlu0
    %v88 = vpop.trf.xlu0
    %v89 = vpop.trf.xlu0
    %90 = vst.msk [vmem:[#allocation2 + $0x10] sm:$0xff] %vm40, %v74
    %91 = vst.msk [vmem:[#allocation2 + $0x18] sm:$0xff] %vm40, %v75
    %s92 = scalar_lea.vmem %s0, 2
    %v93 = vld [vmem:[%s92] sm:$0x3]
    %94 = vxpose.xlu0.b32.start [1/16] %v93, 128
    %95 = vxpose.xlu0.b32.cont [2/16] 0.0, 128
    %96 = vxpose.xlu0.b32.cont [3/16] 0.0, 128
    %97 = vxpose.xlu0.b32.cont [4/16] 0.0, 128
    %98 = vxpose.xlu0.b32.cont [5/16] 0.0, 128
    %99 = vxpose.xlu0.b32.cont [6/16] 0.0, 128
    %100 = vxpose.xlu0.b32.cont [7/16] 0.0, 128
    %101 = vxpose.xlu0.b32.cont [8/16] 0.0, 128
    %102 = vxpose.xlu0.b32.cont [9/16] 0.0, 128
    %103 = vxpose.xlu0.b32.cont [10/16] 0.0, 128
    %104 = vxpose.xlu0.b32.cont [11/16] 0.0, 128
    %105 = vxpose.xlu0.b32.cont [12/16] 0.0, 128
    %106 = vxpose.xlu0.b32.cont [13/16] 0.0, 128
    %107 = vxpose.xlu0.b32.cont [14/16] 0.0, 128
    %108 = vxpose.xlu0.b32.cont [15/16] 0.0, 128
    %109 = vxpose.xlu0.b32.end [16/16] 0.0, 128
    %v110 = vpop.trf.xlu0
    %v111 = vpop.trf.xlu0
    %v112 = vpop.trf.xlu0
    %v113 = vpop.trf.xlu0
    %v114 = vpop.trf.xlu0
    %v115 = vpop.trf.xlu0
    %v116 = vpop.trf.xlu0
    %v117 = vpop.trf.xlu0
    %v118 = vpop.trf.xlu0
    %v119 = vpop.trf.xlu0
    %v120 = vpop.trf.xlu0
    %v121 = vpop.trf.xlu0
    %v122 = vpop.trf.xlu0
    %v123 = vpop.trf.xlu0
    %v124 = vpop.trf.xlu0
    %v125 = vpop.trf.xlu0
    %126 = vst.msk [vmem:[#allocation2 + $0x30] sm:$0xff] %vm40, %v110
    %127 = vst.msk [vmem:[#allocation2 + $0x38] sm:$0xff] %vm40, %v111
    %v128 = vld [vmem:[%s1] sm:$0xff]
    %v129 = vld [vmem:[%s1 + $0x8] sm:$0xff]
    %v130 = vld [vmem:[%s1 + $0x10] sm:$0xff]
    %v131 = vld [vmem:[%s1 + $0x18] sm:$0xff]
    %v132 = vld [vmem:[%s1 + $0x20] sm:$0xff]
    %v133 = vld [vmem:[%s1 + $0x28] sm:$0xff]
    %v134 = vld [vmem:[%s1 + $0x30] sm:$0xff]
    %v135 = vld [vmem:[%s1 + $0x38] sm:$0xff]
    %v136 = vld [vmem:[%s2] sm:$0xff]
    %v137 = vld [vmem:[%s2 + $0x8] sm:$0xff]
    %v138 = vld [vmem:[%s2 + $0x10] sm:$0xff]
    %v139 = vld [vmem:[%s2 + $0x18] sm:$0xff]
    %v140 = vld [vmem:[%s2 + $0x20] sm:$0xff]
    %v141 = vld [vmem:[%s2 + $0x28] sm:$0xff]
    %v142 = vld [vmem:[%s2 + $0x30] sm:$0xff]
    %v143 = vld [vmem:[%s2 + $0x38] sm:$0xff]
    %v144 = vld [vmem:[#allocation2 + $0x7] sm:$0xff]
    %v145 = vld [vmem:[#allocation2 + $0xf] sm:$0xff]
    %v146 = vld [vmem:[#allocation2 + $0x17] sm:$0xff]
    %v147 = vld [vmem:[#allocation2 + $0x1f] sm:$0xff]
    %v148 = vld [vmem:[#allocation2 + $0x27] sm:$0xff]
    %v149 = vld [vmem:[#allocation2 + $0x2f] sm:$0xff]
    %v150 = vld [vmem:[#allocation2 + $0x37] sm:$0xff]
    %v151 = vld [vmem:[#allocation2 + $0x3f] sm:$0xff]
    %v152 = vpack.c.bf16 %v145, %v144
    %v153 = vpack.c.bf16 %v147, %v146
    %v154 = vpack.c.bf16 %v149, %v148
    %v155 = vpack.c.bf16 %v151, %v150
    %v156 = vld [vmem:[%s3] sm:$0x1]
    %v157 = vld [vmem:[#allocation2 + $0x8] sm:$0xff]
    %v158 = vld [vmem:[#allocation2 + $0x10] sm:$0xff]
    %v159 = vld [vmem:[#allocation2 + $0x18] sm:$0xff]
    %v160 = vld [vmem:[#allocation2 + $0x20] sm:$0xff]
    %v161 = vld [vmem:[#allocation2 + $0x28] sm:$0xff]
    %v162 = vld [vmem:[#allocation2 + $0x30] sm:$0xff]
    %v163 = vld [vmem:[#allocation2 + $0x38] sm:$0xff]
    %v164 = vld [vmem:[#allocation2 + $0x40] sm:$0xff]
    %v165 = vpack.c.bf16 %v158, %v157
    %v166 = vpack.c.bf16 %v160, %v159
    %v167 = vpack.c.bf16 %v162, %v161
    %v168 = vpack.c.bf16 %v164, %v163
    %s169 = scalar_lea.vmem %s3, 1
    %v170 = vld [vmem:[%s169] sm:$0x1]
    %v172 = vsel %vm40, %v165, 0
    %v175 = vsel %vm40, %v166, 0
    %v178 = vsel %vm40, %v167, 0
    %v181 = vsel %vm40, %v168, 0
    %vm183 = vcmask 1040384
    %v185 = vsel %vm183, %v170, 0
    %187 = vmatprep.subr.bf16.mxu0 0
    %188 = vmatpush1.bf16.msra.mxu0 %v185
    %189 = vmatprep.subr.bf16.mxu0 0
    %190 = vmatpush1.bf16.msra.mxu0 0
    %191 = vmatprep.subr.bf16.mxu0 0
    %192 = vmatpush1.bf16.msra.mxu0 0
    %193 = vmatprep.subr.bf16.mxu0 0
    %194 = vmatpush1.bf16.msra.mxu0 0
    %195 = vmatprep.subr.bf16.mxu0 0
    %196 = vmatpush1.bf16.msra.mxu0 0
    %197 = vmatprep.subr.bf16.mxu0 0
    %198 = vmatpush1.bf16.msra.mxu0 0
    %199 = vmatprep.subr.bf16.mxu0 0
    %200 = vmatpush1.bf16.msra.mxu0 0
    %201 = vmatprep.subr.bf16.mxu0 0
    %202 = vmatpush1.bf16.msra.mxu0 0
    %203 = vmatprep.subr.bf16.mxu0 0
    %204 = vmatpush1.bf16.msra.mxu0 0
    %205 = vmatprep.subr.bf16.mxu0 0
    %206 = vmatpush1.bf16.msra.mxu0 0
    %207 = vmatprep.subr.bf16.mxu0 0
    %208 = vmatpush1.bf16.msra.mxu0 0
    %209 = vmatprep.subr.bf16.mxu0 0
    %210 = vmatpush1.bf16.msra.mxu0 0
    %211 = vmatprep.subr.bf16.mxu0 0
    %212 = vmatpush1.bf16.msra.mxu0 0
    %213 = vmatprep.subr.bf16.mxu0 0
    %214 = vmatpush1.bf16.msra.mxu0 0
    %215 = vmatprep.subr.bf16.mxu0 0
    %216 = vmatpush1.bf16.msra.mxu0 0
    %217 = vmatprep.subr.bf16.mxu0 0
    %218 = vmatpush1.bf16.msra.mxu0 0
    %219 = vmatprep.mubr.bf16.mxu0 0
    %220 = vmatmul.mubr.bf16.gmra.mrb[0].mxu0 %v172
    %v221 = vpop.f32.mrb[0].mxu0
    %v222 = vadd.f32 0.0, %v221
    %v223 = vpop.f32.mrb[0].mxu0
    %v224 = vpop.f32.mrb[0].mxu0
    %v225 = vadd.f32 0.0, %v224
    %v226 = vpop.f32.mrb[0].mxu0
    %227 = vmatprep.mubr.bf16.mxu0 0
    %228 = vmatmul.mubr.bf16.gmra.mrb[0].mxu0 %v175
    %v229 = vpop.f32.mrb[0].mxu0
    %v230 = vadd.f32 0.0, %v229
    %v231 = vpop.f32.mrb[0].mxu0
    %v232 = vpop.f32.mrb[0].mxu0
    %v233 = vadd.f32 0.0, %v232
    %v234 = vpop.f32.mrb[0].mxu0
    %235 = vmatprep.mubr.bf16.mxu0 0
    %236 = vmatmul.mubr.bf16.gmra.mrb[0].mxu0 %v178
    %v237 = vpop.f32.mrb[0].mxu0
    %v238 = vadd.f32 0.0, %v237
    %v239 = vpop.f32.mrb[0].mxu0
    %v240 = vpop.f32.mrb[0].mxu0
    %v241 = vadd.f32 0.0, %v240
    %v242 = vpop.f32.mrb[0].mxu0
    %243 = vmatprep.mubr.bf16.mxu0 0
    %244 = vmatmul.mubr.bf16.gmra.mrb[0].mxu0 %v181
    %v245 = vpop.f32.mrb[0].mxu0
    %v246 = vadd.f32 0.0, %v245
    %v247 = vpop.f32.mrb[0].mxu0
    %v248 = vpop.f32.mrb[0].mxu0
    %v249 = vadd.f32 0.0, %v248
    %v250 = vpop.f32.mrb[0].mxu0
    %251 = vdwg.mxu0
    %v253 = vsel %vm40, %v152, 0
    %v256 = vsel %vm40, %v153, 0
    %v259 = vsel %vm40, %v154, 0
    %v262 = vsel %vm40, %v155, 0
    %v265 = vsel %vm183, %v156, 0
    %267 = vmatprep.subr.bf16.mxu0 0
    %268 = vmatpush1.bf16.msra.mxu0 %v265
    %269 = vmatprep.subr.bf16.mxu0 0
    %270 = vmatpush1.bf16.msra.mxu0 0
    %271 = vmatprep.subr.bf16.mxu0 0
    %272 = vmatpush1.bf16.msra.mxu0 0
    %273 = vmatprep.subr.bf16.mxu0 0
    %274 = vmatpush1.bf16.msra.mxu0 0
    %275 = vmatprep.subr.bf16.mxu0 0
    %276 = vmatpush1.bf16.msra.mxu0 0
    %277 = vmatprep.subr.bf16.mxu0 0
    %278 = vmatpush1.bf16.msra.mxu0 0
    %279 = vmatprep.subr.bf16.mxu0 0
    %280 = vmatpush1.bf16.msra.mxu0 0
    %281 = vmatprep.subr.bf16.mxu0 0
    %282 = vmatpush1.bf16.msra.mxu0 0
    %283 = vmatprep.subr.bf16.mxu0 0
    %284 = vmatpush1.bf16.msra.mxu0 0
    %285 = vmatprep.subr.bf16.mxu0 0
    %286 = vmatpush1.bf16.msra.mxu0 0
    %287 = vmatprep.subr.bf16.mxu0 0
    %288 = vmatpush1.bf16.msra.mxu0 0
    %289 = vmatprep.subr.bf16.mxu0 0
    %290 = vmatpush1.bf16.msra.mxu0 0
    %291 = vmatprep.subr.bf16.mxu0 0
    %292 = vmatpush1.bf16.msra.mxu0 0
    %293 = vmatprep.subr.bf16.mxu0 0
    %294 = vmatpush1.bf16.msra.mxu0 0
    %295 = vmatprep.subr.bf16.mxu0 0
    %296 = vmatpush1.bf16.msra.mxu0 0
    %297 = vmatprep.subr.bf16.mxu0 0
    %298 = vmatpush1.bf16.msra.mxu0 0
    %299 = vmatprep.mubr.bf16.mxu0 0
    %300 = vmatmul.mubr.bf16.gmra.mrb[0].mxu0 %v253
    %v301 = vpop.f32.mrb[0].mxu0
    %v302 = vadd.f32 %v222, %v301
    %v303 = vpop.f32.mrb[0].mxu0
    %v304 = vpop.f32.mrb[0].mxu0
    %v305 = vadd.f32 %v225, %v304
    %v306 = vpop.f32.mrb[0].mxu0
    %307 = vmatprep.mubr.bf16.mxu0 0
    %308 = vmatmul.mubr.bf16.gmra.mrb[0].mxu0 %v256
    %v309 = vpop.f32.mrb[0].mxu0
    %v310 = vadd.f32 %v230, %v309
    %v311 = vpop.f32.mrb[0].mxu0
    %v312 = vpop.f32.mrb[0].mxu0
    %v313 = vadd.f32 %v233, %v312
    %v314 = vpop.f32.mrb[0].mxu0
    %315 = vmatprep.mubr.bf16.mxu0 0
    %316 = vmatmul.mubr.bf16.gmra.mrb[0].mxu0 %v259
    %v317 = vpop.f32.mrb[0].mxu0
    %v318 = vadd.f32 %v238, %v317
    %v319 = vpop.f32.mrb[0].mxu0
    %v320 = vpop.f32.mrb[0].mxu0
    %v321 = vadd.f32 %v241, %v320
    %v322 = vpop.f32.mrb[0].mxu0
    %323 = vmatprep.mubr.bf16.mxu0 0
    %324 = vmatmul.mubr.bf16.gmra.mrb[0].mxu0 %v262
    %v325 = vpop.f32.mrb[0].mxu0
    %v326 = vadd.f32 %v246, %v325
    %v327 = vpop.f32.mrb[0].mxu0
    %v328 = vpop.f32.mrb[0].mxu0
    %v329 = vadd.f32 %v249, %v328
    %v330 = vpop.f32.mrb[0].mxu0
    %331 = vdwg.mxu0
    %v332 = vld [vmem:[#allocation2 + $0x9] sm:$0xff]
    %v333 = vld [vmem:[#allocation2 + $0x11] sm:$0xff]
    %v334 = vld [vmem:[#allocation2 + $0x19] sm:$0xff]
    %v335 = vld [vmem:[#allocation2 + $0x21] sm:$0xff]
    %v336 = vld [vmem:[#allocation2 + $0x29] sm:$0xff]
    %v337 = vld [vmem:[#allocation2 + $0x31] sm:$0xff]
    %v338 = vld [vmem:[#allocation2 + $0x39] sm:$0xff]
    %v339 = vld [vmem:[#allocation2 + $0x41] sm:$0xff]
    %v340 = vpack.c.bf16 %v333, %v332
    %v341 = vpack.c.bf16 %v335, %v334
    %v342 = vpack.c.bf16 %v337, %v336
    %v343 = vpack.c.bf16 %v339, %v338
    %s344 = scalar_lea.vmem %s3, 2
    %v345 = vld [vmem:[%s344] sm:$0x1]
    %v347 = vsel %vm40, %v340, 0
    %v350 = vsel %vm40, %v341, 0
    %v353 = vsel %vm40, %v342, 0
    %v356 = vsel %vm40, %v343, 0
    %v359 = vsel %vm183, %v345, 0
    %361 = vmatprep.subr.bf16.mxu0 0
    %362 = vmatpush1.bf16.msra.mxu0 %v359
    %363 = vmatprep.subr.bf16.mxu0 0
    %364 = vmatpush1.bf16.msra.mxu0 0
    %365 = vmatprep.subr.bf16.mxu0 0
    %366 = vmatpush1.bf16.msra.mxu0 0
    %367 = vmatprep.subr.bf16.mxu0 0
    %368 = vmatpush1.bf16.msra.mxu0 0
    %369 = vmatprep.subr.bf16.mxu0 0
    %370 = vmatpush1.bf16.msra.mxu0 0
    %371 = vmatprep.subr.bf16.mxu0 0
    %372 = vmatpush1.bf16.msra.mxu0 0
    %373 = vmatprep.subr.bf16.mxu0 0
    %374 = vmatpush1.bf16.msra.mxu0 0
    %375 = vmatprep.subr.bf16.mxu0 0
    %376 = vmatpush1.bf16.msra.mxu0 0
    %377 = vmatprep.subr.bf16.mxu0 0
    %378 = vmatpush1.bf16.msra.mxu0 0
    %379 = vmatprep.subr.bf16.mxu0 0
    %380 = vmatpush1.bf16.msra.mxu0 0
    %381 = vmatprep.subr.bf16.mxu0 0
    %382 = vmatpush1.bf16.msra.mxu0 0
    %383 = vmatprep.subr.bf16.mxu0 0
    %384 = vmatpush1.bf16.msra.mxu0 0
    %385 = vmatprep.subr.bf16.mxu0 0
    %386 = vmatpush1.bf16.msra.mxu0 0
    %387 = vmatprep.subr.bf16.mxu0 0
    %388 = vmatpush1.bf16.msra.mxu0 0
    %389 = vmatprep.subr.bf16.mxu0 0
    %390 = vmatpush1.bf16.msra.mxu0 0
    %391 = vmatprep.subr.bf16.mxu0 0
    %392 = vmatpush1.bf16.msra.mxu0 0
    %393 = vmatprep.mubr.bf16.mxu0 0
    %394 = vmatmul.mubr.bf16.gmra.mrb[0].mxu0 %v347
    %v395 = vpop.f32.mrb[0].mxu0
    %v396 = vadd.f32 0.0, %v395
    %v397 = vpop.f32.mrb[0].mxu0
    %v398 = vpop.f32.mrb[0].mxu0
    %v399 = vadd.f32 0.0, %v398
    %v400 = vpop.f32.mrb[0].mxu0
    %401 = vmatprep.mubr.bf16.mxu0 0
    %402 = vmatmul.mubr.bf16.gmra.mrb[0].mxu0 %v350
    %v403 = vpop.f32.mrb[0].mxu0
    %v404 = vadd.f32 0.0, %v403
    %v405 = vpop.f32.mrb[0].mxu0
    %v406 = vpop.f32.mrb[0].mxu0
    %v407 = vadd.f32 0.0, %v406
    %v408 = vpop.f32.mrb[0].mxu0
    %409 = vmatprep.mubr.bf16.mxu0 0
    %410 = vmatmul.mubr.bf16.gmra.mrb[0].mxu0 %v353
    %v411 = vpop.f32.mrb[0].mxu0
    %v412 = vadd.f32 0.0, %v411
    %v413 = vpop.f32.mrb[0].mxu0
    %v414 = vpop.f32.mrb[0].mxu0
    %v415 = vadd.f32 0.0, %v414
    %v416 = vpop.f32.mrb[0].mxu0
    %417 = vmatprep.mubr.bf16.mxu0 0
    %418 = vmatmul.mubr.bf16.gmra.mrb[0].mxu0 %v356
    %v419 = vpop.f32.mrb[0].mxu0
    %v420 = vadd.f32 0.0, %v419
    %v421 = vpop.f32.mrb[0].mxu0
    %v422 = vpop.f32.mrb[0].mxu0
    %v423 = vadd.f32 0.0, %v422
    %v424 = vpop.f32.mrb[0].mxu0
    %425 = vdwg.mxu0
    %v426 = vadd.f32 %v302, %v396
    %v427 = vadd.f32 %v305, %v399
    %v428 = vadd.f32 %v310, %v404
    %v429 = vadd.f32 %v313, %v407
    %v430 = vadd.f32 %v318, %v412
    %v431 = vadd.f32 %v321, %v415
    %v432 = vadd.f32 %v326, %v420
    %v433 = vadd.f32 %v329, %v423
    %v434 = vld [vmem:[%s4] sm:$0x1]
    %v436 = vlaneseq
    %v437 = vshrl.u32 %v436, 7
    %v438 = vsub.s32 0, %v437
    %v439 = vrot.slane %v434, %v438
    %v441 = vadd.f32 %v426, %v439
    %v442 = vadd.f32 %v427, %v439
    %v443 = vadd.f32 %v428, %v439
    %v444 = vadd.f32 %v429, %v439
    %v445 = vadd.f32 %v430, %v439
    %v446 = vadd.f32 %v431, %v439
    %v447 = vadd.f32 %v432, %v439
    %v448 = vadd.f32 %v433, %v439
    %v449 = vmax.f32 %v441, 0.0
    %v450 = vmax.f32 %v442, 0.0
    %v451 = vmax.f32 %v443, 0.0
    %v452 = vmax.f32 %v444, 0.0
    %v453 = vmax.f32 %v445, 0.0
    %v454 = vmax.f32 %v446, 0.0
    %v455 = vmax.f32 %v447, 0.0
    %v456 = vmax.f32 %v448, 0.0
    %458 = vset.pattern.permute.xlu0 0
    %459 = vperm.xlu0 %458, %v128
    %v460 = vpop.permute.xlu0 %459
    %463 = vset.pattern.permute.xlu0 0
    %464 = vperm.xlu0 %463, %v129
    %v465 = vpop.permute.xlu0 %464
    %468 = vset.pattern.permute.xlu0 0
    %469 = vperm.xlu0 %468, %v130
    %v470 = vpop.permute.xlu0 %469
    %473 = vset.pattern.permute.xlu0 0
    %474 = vperm.xlu0 %473, %v131
    %v475 = vpop.permute.xlu0 %474
    %478 = vset.pattern.permute.xlu0 0
    %479 = vperm.xlu0 %478, %v132
    %v480 = vpop.permute.xlu0 %479
    %483 = vset.pattern.permute.xlu0 0
    %484 = vperm.xlu0 %483, %v133
    %v485 = vpop.permute.xlu0 %484
    %488 = vset.pattern.permute.xlu0 0
    %489 = vperm.xlu0 %488, %v134
    %v490 = vpop.permute.xlu0 %489
    %493 = vset.pattern.permute.xlu0 0
    %494 = vperm.xlu0 %493, %v135
    %v495 = vpop.permute.xlu0 %494
    %v497 = vmul.f32 %v449, %v460
    %v498 = vmul.f32 %v450, %v465
    %v499 = vmul.f32 %v451, %v470
    %v500 = vmul.f32 %v452, %v475
    %v501 = vmul.f32 %v453, %v480
    %v502 = vmul.f32 %v454, %v485
    %v503 = vmul.f32 %v455, %v490
    %v504 = vmul.f32 %v456, %v495
    %505 = vst.msk [vmem:[#allocation3 + $0x8] sm:$0xff] %vm51, %v497
    %506 = vst.msk [vmem:[#allocation3 + $0x10] sm:$0xff] %vm51, %v498
    %507 = vst.msk [vmem:[#allocation3 + $0x18] sm:$0xff] %vm51, %v499
    %508 = vst.msk [vmem:[#allocation3 + $0x20] sm:$0xff] %vm51, %v500
    %509 = vst.msk [vmem:[#allocation3 + $0x28] sm:$0xff] %vm51, %v501
    %510 = vst.msk [vmem:[#allocation3 + $0x30] sm:$0xff] %vm51, %v502
    %511 = vst.msk [vmem:[#allocation3 + $0x38] sm:$0xff] %vm51, %v503
    %512 = vst.msk [vmem:[#allocation3 + $0x40] sm:$0xff] %vm51, %v504
    %v513 = vld [vmem:[#allocation3 + $0x7] sm:$0xff]
    %v514 = vld [vmem:[#allocation3 + $0xf] sm:$0xff]
    %v515 = vld [vmem:[#allocation3 + $0x17] sm:$0xff]
    %v516 = vld [vmem:[#allocation3 + $0x1f] sm:$0xff]
    %v517 = vld [vmem:[#allocation3 + $0x27] sm:$0xff]
    %v518 = vld [vmem:[#allocation3 + $0x2f] sm:$0xff]
    %v519 = vld [vmem:[#allocation3 + $0x37] sm:$0xff]
    %v520 = vld [vmem:[#allocation3 + $0x3f] sm:$0xff]
    %v521 = vpack.c.bf16 %v514, %v513
    %v522 = vpack.c.bf16 %v516, %v515
    %v523 = vpack.c.bf16 %v518, %v517
    %v524 = vpack.c.bf16 %v520, %v519
    %v525 = vld [vmem:[%s5] sm:$0xf]
    %v526 = vld [vmem:[#allocation3 + $0x8] sm:$0xff]
    %v527 = vld [vmem:[#allocation3 + $0x10] sm:$0xff]
    %v528 = vld [vmem:[#allocation3 + $0x18] sm:$0xff]
    %v529 = vld [vmem:[#allocation3 + $0x20] sm:$0xff]
    %v530 = vld [vmem:[#allocation3 + $0x28] sm:$0xff]
    %v531 = vld [vmem:[#allocation3 + $0x30] sm:$0xff]
    %v532 = vld [vmem:[#allocation3 + $0x38] sm:$0xff]
    %v533 = vld [vmem:[#allocation3 + $0x40] sm:$0xff]
    %v534 = vpack.c.bf16 %v527, %v526
    %v535 = vpack.c.bf16 %v529, %v528
    %v536 = vpack.c.bf16 %v531, %v530
    %v537 = vpack.c.bf16 %v533, %v532
    %s538 = scalar_lea.vmem %s5, 4
    %v539 = vld [vmem:[%s538] sm:$0xf]
    %v541 = vsel %vm51, %v534, 0
    %v544 = vsel %vm51, %v535, 0
    %v547 = vsel %vm51, %v536, 0
    %v550 = vsel %vm51, %v537, 0
    %vm552 = vcmask 1043456
    %v554 = vsel %vm552, %v539, 0
    %556 = vmatprep.subr.bf16.mxu0 0
    %557 = vmatpush1.bf16.msra.mxu0 %v554
    %558 = vmatprep.subr.bf16.mxu0 0
    %559 = vmatpush1.bf16.msra.mxu0 0
    %560 = vmatprep.subr.bf16.mxu0 0
    %561 = vmatpush1.bf16.msra.mxu0 0
    %562 = vmatprep.subr.bf16.mxu0 0
    %563 = vmatpush1.bf16.msra.mxu0 0
    %564 = vmatprep.subr.bf16.mxu0 0
    %565 = vmatpush1.bf16.msra.mxu0 0
    %566 = vmatprep.subr.bf16.mxu0 0
    %567 = vmatpush1.bf16.msra.mxu0 0
    %568 = vmatprep.subr.bf16.mxu0 0
    %569 = vmatpush1.bf16.msra.mxu0 0
    %570 = vmatprep.subr.bf16.mxu0 0
    %571 = vmatpush1.bf16.msra.mxu0 0
    %572 = vmatprep.subr.bf16.mxu0 0
    %573 = vmatpush1.bf16.msra.mxu0 0
    %574 = vmatprep.subr.bf16.mxu0 0
    %575 = vmatpush1.bf16.msra.mxu0 0
    %576 = vmatprep.subr.bf16.mxu0 0
    %577 = vmatpush1.bf16.msra.mxu0 0
    %578 = vmatprep.subr.bf16.mxu0 0
    %579 = vmatpush1.bf16.msra.mxu0 0
    %580 = vmatprep.subr.bf16.mxu0 0
    %581 = vmatpush1.bf16.msra.mxu0 0
    %582 = vmatprep.subr.bf16.mxu0 0
    %583 = vmatpush1.bf16.msra.mxu0 0
    %584 = vmatprep.subr.bf16.mxu0 0
    %585 = vmatpush1.bf16.msra.mxu0 0
    %586 = vmatprep.subr.bf16.mxu0 0
    %587 = vmatpush1.bf16.msra.mxu0 0
    %588 = vmatprep.mubr.bf16.mxu0 0
    %589 = vmatmul.mubr.bf16.gmra.mrb[0].mxu0 %v541
    %v590 = vpop.f32.mrb[0].mxu0
    %v591 = vadd.f32 0.0, %v590
    %v592 = vpop.f32.mrb[0].mxu0
    %v593 = vpop.f32.mrb[0].mxu0
    %v594 = vadd.f32 0.0, %v593
    %v595 = vpop.f32.mrb[0].mxu0
    %596 = vmatprep.mubr.bf16.mxu0 0
    %597 = vmatmul.mubr.bf16.gmra.mrb[0].mxu0 %v544
    %v598 = vpop.f32.mrb[0].mxu0
    %v599 = vadd.f32 0.0, %v598
    %v600 = vpop.f32.mrb[0].mxu0
    %v601 = vpop.f32.mrb[0].mxu0
    %v602 = vadd.f32 0.0, %v601
    %v603 = vpop.f32.mrb[0].mxu0
    %604 = vmatprep.mubr.bf16.mxu0 0
    %605 = vmatmul.mubr.bf16.gmra.mrb[0].mxu0 %v547
    %v606 = vpop.f32.mrb[0].mxu0
    %v607 = vadd.f32 0.0, %v606
    %v608 = vpop.f32.mrb[0].mxu0
    %v609 = vpop.f32.mrb[0].mxu0
    %v610 = vadd.f32 0.0, %v609
    %v611 = vpop.f32.mrb[0].mxu0
    %612 = vmatprep.mubr.bf16.mxu0 0
    %613 = vmatmul.mubr.bf16.gmra.mrb[0].mxu0 %v550
    %v614 = vpop.f32.mrb[0].mxu0
    %v615 = vadd.f32 0.0, %v614
    %v616 = vpop.f32.mrb[0].mxu0
    %v617 = vpop.f32.mrb[0].mxu0
    %v618 = vadd.f32 0.0, %v617
    %v619 = vpop.f32.mrb[0].mxu0
    %620 = vdwg.mxu0
    %v622 = vsel %vm51, %v521, 0
    %v625 = vsel %vm51, %v522, 0
    %v628 = vsel %vm51, %v523, 0
    %v631 = vsel %vm51, %v524, 0
    %v634 = vsel %vm552, %v525, 0
    %636 = vmatprep.subr.bf16.mxu0 0
    %637 = vmatpush1.bf16.msra.mxu0 %v634
    %638 = vmatprep.subr.bf16.mxu0 0
    %639 = vmatpush1.bf16.msra.mxu0 0
    %640 = vmatprep.subr.bf16.mxu0 0
    %641 = vmatpush1.bf16.msra.mxu0 0
    %642 = vmatprep.subr.bf16.mxu0 0
    %643 = vmatpush1.bf16.msra.mxu0 0
    %644 = vmatprep.subr.bf16.mxu0 0
    %645 = vmatpush1.bf16.msra.mxu0 0
    %646 = vmatprep.subr.bf16.mxu0 0
    %647 = vmatpush1.bf16.msra.mxu0 0
    %648 = vmatprep.subr.bf16.mxu0 0
    %649 = vmatpush1.bf16.msra.mxu0 0
    %650 = vmatprep.subr.bf16.mxu0 0
    %651 = vmatpush1.bf16.msra.mxu0 0
    %652 = vmatprep.subr.bf16.mxu0 0
    %653 = vmatpush1.bf16.msra.mxu0 0
    %654 = vmatprep.subr.bf16.mxu0 0
    %655 = vmatpush1.bf16.msra.mxu0 0
    %656 = vmatprep.subr.bf16.mxu0 0
    %657 = vmatpush1.bf16.msra.mxu0 0
    %658 = vmatprep.subr.bf16.mxu0 0
    %659 = vmatpush1.bf16.msra.mxu0 0
    %660 = vmatprep.subr.bf16.mxu0 0
    %661 = vmatpush1.bf16.msra.mxu0 0
    %662 = vmatprep.subr.bf16.mxu0 0
    %663 = vmatpush1.bf16.msra.mxu0 0
    %664 = vmatprep.subr.bf16.mxu0 0
    %665 = vmatpush1.bf16.msra.mxu0 0
    %666 = vmatprep.subr.bf16.mxu0 0
    %667 = vmatpush1.bf16.msra.mxu0 0
    %668 = vmatprep.mubr.bf16.mxu0 0
    %669 = vmatmul.mubr.bf16.gmra.mrb[0].mxu0 %v622
    %v670 = vpop.f32.mrb[0].mxu0
    %v671 = vadd.f32 %v591, %v670
    %v672 = vpop.f32.mrb[0].mxu0
    %v673 = vpop.f32.mrb[0].mxu0
    %v674 = vadd.f32 %v594, %v673
    %v675 = vpop.f32.mrb[0].mxu0
    %676 = vmatprep.mubr.bf16.mxu0 0
    %677 = vmatmul.mubr.bf16.gmra.mrb[0].mxu0 %v625
    %v678 = vpop.f32.mrb[0].mxu0
    %v679 = vadd.f32 %v599, %v678
    %v680 = vpop.f32.mrb[0].mxu0
    %v681 = vpop.f32.mrb[0].mxu0
    %v682 = vadd.f32 %v602, %v681
    %v683 = vpop.f32.mrb[0].mxu0
    %684 = vmatprep.mubr.bf16.mxu0 0
    %685 = vmatmul.mubr.bf16.gmra.mrb[0].mxu0 %v628
    %v686 = vpop.f32.mrb[0].mxu0
    %v687 = vadd.f32 %v607, %v686
    %v688 = vpop.f32.mrb[0].mxu0
    %v689 = vpop.f32.mrb[0].mxu0
    %v690 = vadd.f32 %v610, %v689
    %v691 = vpop.f32.mrb[0].mxu0
    %692 = vmatprep.mubr.bf16.mxu0 0
    %693 = vmatmul.mubr.bf16.gmra.mrb[0].mxu0 %v631
    %v694 = vpop.f32.mrb[0].mxu0
    %v695 = vadd.f32 %v615, %v694
    %v696 = vpop.f32.mrb[0].mxu0
    %v697 = vpop.f32.mrb[0].mxu0
    %v698 = vadd.f32 %v618, %v697
    %v699 = vpop.f32.mrb[0].mxu0
    %700 = vdwg.mxu0
    %v701 = vld [vmem:[#allocation3 + $0x9] sm:$0xff]
    %v702 = vld [vmem:[#allocation3 + $0x11] sm:$0xff]
    %v703 = vld [vmem:[#allocation3 + $0x19] sm:$0xff]
    %v704 = vld [vmem:[#allocation3 + $0x21] sm:$0xff]
    %v705 = vld [vmem:[#allocation3 + $0x29] sm:$0xff]
    %v706 = vld [vmem:[#allocation3 + $0x31] sm:$0xff]
    %v707 = vld [vmem:[#allocation3 + $0x39] sm:$0xff]
    %v708 = vld [vmem:[#allocation3 + $0x41] sm:$0xff]
    %v709 = vpack.c.bf16 %v702, %v701
    %v710 = vpack.c.bf16 %v704, %v703
    %v711 = vpack.c.bf16 %v706, %v705
    %v712 = vpack.c.bf16 %v708, %v707
    %s713 = scalar_lea.vmem %s5, 8
    %v714 = vld [vmem:[%s713] sm:$0xf]
    %v716 = vsel %vm51, %v709, 0
    %v719 = vsel %vm51, %v710, 0
    %v722 = vsel %vm51, %v711, 0
    %v725 = vsel %vm51, %v712, 0
    %v728 = vsel %vm552, %v714, 0
    %730 = vmatprep.subr.bf16.mxu0 0
    %731 = vmatpush1.bf16.msra.mxu0 %v728
    %732 = vmatprep.subr.bf16.mxu0 0
    %733 = vmatpush1.bf16.msra.mxu0 0
    %734 = vmatprep.subr.bf16.mxu0 0
    %735 = vmatpush1.bf16.msra.mxu0 0
    %736 = vmatprep.subr.bf16.mxu0 0
    %737 = vmatpush1.bf16.msra.mxu0 0
    %738 = vmatprep.subr.bf16.mxu0 0
    %739 = vmatpush1.bf16.msra.mxu0 0
    %740 = vmatprep.subr.bf16.mxu0 0
    %741 = vmatpush1.bf16.msra.mxu0 0
    %742 = vmatprep.subr.bf16.mxu0 0
    %743 = vmatpush1.bf16.msra.mxu0 0
    %744 = vmatprep.subr.bf16.mxu0 0
    %745 = vmatpush1.bf16.msra.mxu0 0
    %746 = vmatprep.subr.bf16.mxu0 0
    %747 = vmatpush1.bf16.msra.mxu0 0
    %748 = vmatprep.subr.bf16.mxu0 0
    %749 = vmatpush1.bf16.msra.mxu0 0
    %750 = vmatprep.subr.bf16.mxu0 0
    %751 = vmatpush1.bf16.msra.mxu0 0
    %752 = vmatprep.subr.bf16.mxu0 0
    %753 = vmatpush1.bf16.msra.mxu0 0
    %754 = vmatprep.subr.bf16.mxu0 0
    %755 = vmatpush1.bf16.msra.mxu0 0
    %756 = vmatprep.subr.bf16.mxu0 0
    %757 = vmatpush1.bf16.msra.mxu0 0
    %758 = vmatprep.subr.bf16.mxu0 0
    %759 = vmatpush1.bf16.msra.mxu0 0
    %760 = vmatprep.subr.bf16.mxu0 0
    %761 = vmatpush1.bf16.msra.mxu0 0
    %762 = vmatprep.mubr.bf16.mxu0 0
    %763 = vmatmul.mubr.bf16.gmra.mrb[0].mxu0 %v716
    %v764 = vpop.f32.mrb[0].mxu0
    %v765 = vadd.f32 0.0, %v764
    %v766 = vpop.f32.mrb[0].mxu0
    %v767 = vpop.f32.mrb[0].mxu0
    %v768 = vadd.f32 0.0, %v767
    %v769 = vpop.f32.mrb[0].mxu0
    %770 = vmatprep.mubr.bf16.mxu0 0
    %771 = vmatmul.mubr.bf16.gmra.mrb[0].mxu0 %v719
    %v772 = vpop.f32.mrb[0].mxu0
    %v773 = vadd.f32 0.0, %v772
    %v774 = vpop.f32.mrb[0].mxu0
    %v775 = vpop.f32.mrb[0].mxu0
    %v776 = vadd.f32 0.0, %v775
    %v777 = vpop.f32.mrb[0].mxu0
    %778 = vmatprep.mubr.bf16.mxu0 0
    %779 = vmatmul.mubr.bf16.gmra.mrb[0].mxu0 %v722
    %v780 = vpop.f32.mrb[0].mxu0
    %v781 = vadd.f32 0.0, %v780
    %v782 = vpop.f32.mrb[0].mxu0
    %v783 = vpop.f32.mrb[0].mxu0
    %v784 = vadd.f32 0.0, %v783
    %v785 = vpop.f32.mrb[0].mxu0
    %786 = vmatprep.mubr.bf16.mxu0 0
    %787 = vmatmul.mubr.bf16.gmra.mrb[0].mxu0 %v725
    %v788 = vpop.f32.mrb[0].mxu0
    %v789 = vadd.f32 0.0, %v788
    %v790 = vpop.f32.mrb[0].mxu0
    %v791 = vpop.f32.mrb[0].mxu0
    %v792 = vadd.f32 0.0, %v791
    %v793 = vpop.f32.mrb[0].mxu0
    %794 = vdwg.mxu0
    %v795 = vadd.f32 %v671, %v765
    %v796 = vadd.f32 %v674, %v768
    %v797 = vadd.f32 %v679, %v773
    %v798 = vadd.f32 %v682, %v776
    %v799 = vadd.f32 %v687, %v781
    %v800 = vadd.f32 %v690, %v784
    %v801 = vadd.f32 %v695, %v789
    %v802 = vadd.f32 %v698, %v792
    %v803 = vld [vmem:[%s6] sm:$0x1]
    %v805 = vlaneseq
    %v806 = vshrl.u32 %v805, 7
    %v807 = vsub.s32 0, %v806
    %v808 = vrot.slane %v803, %v807
    %v810 = vadd.f32 %v795, %v808
    %v811 = vadd.f32 %v796, %v808
    %v812 = vadd.f32 %v797, %v808
    %v813 = vadd.f32 %v798, %v808
    %v814 = vadd.f32 %v799, %v808
    %v815 = vadd.f32 %v800, %v808
    %v816 = vadd.f32 %v801, %v808
    %v817 = vadd.f32 %v802, %v808
    %v818 = vmax.f32 %v810, 0.0
    %v819 = vmax.f32 %v811, 0.0
    %v820 = vmax.f32 %v812, 0.0
    %v821 = vmax.f32 %v813, 0.0
    %v822 = vmax.f32 %v814, 0.0
    %v823 = vmax.f32 %v815, 0.0
    %v824 = vmax.f32 %v816, 0.0
    %v825 = vmax.f32 %v817, 0.0
    %827 = vset.pattern.permute.xlu0 0
    %828 = vperm.xlu0 %827, %v136
    %v829 = vpop.permute.xlu0 %828
    %832 = vset.pattern.permute.xlu0 0
    %833 = vperm.xlu0 %832, %v137
    %v834 = vpop.permute.xlu0 %833
    %837 = vset.pattern.permute.xlu0 0
    %838 = vperm.xlu0 %837, %v138
    %v839 = vpop.permute.xlu0 %838
    %842 = vset.pattern.permute.xlu0 0
    %843 = vperm.xlu0 %842, %v139
    %v844 = vpop.permute.xlu0 %843
    %847 = vset.pattern.permute.xlu0 0
    %848 = vperm.xlu0 %847, %v140
    %v849 = vpop.permute.xlu0 %848
    %852 = vset.pattern.permute.xlu0 0
    %853 = vperm.xlu0 %852, %v141
    %v854 = vpop.permute.xlu0 %853
    %857 = vset.pattern.permute.xlu0 0
    %858 = vperm.xlu0 %857, %v142
    %v859 = vpop.permute.xlu0 %858
    %862 = vset.pattern.permute.xlu0 0
    %863 = vperm.xlu0 %862, %v143
    %v864 = vpop.permute.xlu0 %863
    %v866 = vmul.f32 %v818, %v829
    %v867 = vmul.f32 %v819, %v834
    %v868 = vmul.f32 %v820, %v839
    %v869 = vmul.f32 %v821, %v844
    %v870 = vmul.f32 %v822, %v849
    %v871 = vmul.f32 %v823, %v854
    %v872 = vmul.f32 %v824, %v859
    %v873 = vmul.f32 %v825, %v864
    %874 = vst.msk [vmem:[#allocation4 + $0x8] sm:$0xff] %vm54, %v866
    %875 = vst.msk [vmem:[#allocation4 + $0x10] sm:$0xff] %vm54, %v867
    %876 = vst.msk [vmem:[#allocation4 + $0x18] sm:$0xff] %vm54, %v868
    %877 = vst.msk [vmem:[#allocation4 + $0x20] sm:$0xff] %vm54, %v869
    %878 = vst.msk [vmem:[#allocation4 + $0x28] sm:$0xff] %vm54, %v870
    %879 = vst.msk [vmem:[#allocation4 + $0x30] sm:$0xff] %vm54, %v871
    %880 = vst.msk [vmem:[#allocation4 + $0x38] sm:$0xff] %vm54, %v872
    %881 = vst.msk [vmem:[#allocation4 + $0x40] sm:$0xff] %vm54, %v873
    %v882 = vld [vmem:[#allocation4 + $0x7] sm:$0xff]
    %v883 = vld [vmem:[#allocation4 + $0xf] sm:$0xff]
    %v884 = vld [vmem:[#allocation4 + $0x17] sm:$0xff]
    %v885 = vld [vmem:[#allocation4 + $0x1f] sm:$0xff]
    %v886 = vld [vmem:[#allocation4 + $0x27] sm:$0xff]
    %v887 = vld [vmem:[#allocation4 + $0x2f] sm:$0xff]
    %v888 = vld [vmem:[#allocation4 + $0x37] sm:$0xff]
    %v889 = vld [vmem:[#allocation4 + $0x3f] sm:$0xff]
    %v890 = vadd.f32 %v866, %v882
    %v891 = vadd.f32 %v867, %v883
    %v892 = vadd.f32 %v868, %v884
    %v893 = vadd.f32 %v869, %v885
    %v894 = vadd.f32 %v870, %v886
    %v895 = vadd.f32 %v871, %v887
    %v896 = vadd.f32 %v872, %v888
    %v897 = vadd.f32 %v873, %v889
    %v898 = vmul.f32 %v890, %v460
    %v899 = vmul.f32 %v891, %v465
    %v900 = vmul.f32 %v892, %v470
    %v901 = vmul.f32 %v893, %v475
    %v902 = vmul.f32 %v894, %v480
    %v903 = vmul.f32 %v895, %v485
    %v904 = vmul.f32 %v896, %v490
    %v905 = vmul.f32 %v897, %v495
    %906 = vst.msk [vmem:[#allocation4 + $0x8] sm:$0xff] %vm54, %v898
    %907 = vst.msk [vmem:[#allocation4 + $0x10] sm:$0xff] %vm54, %v899
    %908 = vst.msk [vmem:[#allocation4 + $0x18] sm:$0xff] %vm54, %v900
    %909 = vst.msk [vmem:[#allocation4 + $0x20] sm:$0xff] %vm54, %v901
    %910 = vst.msk [vmem:[#allocation4 + $0x28] sm:$0xff] %vm54, %v902
    %911 = vst.msk [vmem:[#allocation4 + $0x30] sm:$0xff] %vm54, %v903
    %912 = vst.msk [vmem:[#allocation4 + $0x38] sm:$0xff] %vm54, %v904
    %913 = vst.msk [vmem:[#allocation4 + $0x40] sm:$0xff] %vm54, %v905
    %v914 = vld [vmem:[#allocation4 + $0x7] sm:$0xff]
    %v915 = vld [vmem:[#allocation4 + $0xf] sm:$0xff]
    %v916 = vld [vmem:[#allocation4 + $0x17] sm:$0xff]
    %v917 = vld [vmem:[#allocation4 + $0x1f] sm:$0xff]
    %v918 = vld [vmem:[#allocation4 + $0x27] sm:$0xff]
    %v919 = vld [vmem:[#allocation4 + $0x2f] sm:$0xff]
    %v920 = vld [vmem:[#allocation4 + $0x37] sm:$0xff]
    %v921 = vld [vmem:[#allocation4 + $0x3f] sm:$0xff]
    %v922 = vpack.c.bf16 %v915, %v914
    %v923 = vpack.c.bf16 %v917, %v916
    %v924 = vpack.c.bf16 %v919, %v918
    %v925 = vpack.c.bf16 %v921, %v920
    %v926 = vld [vmem:[%s7] sm:$0xf]
    %v927 = vld [vmem:[%s7 + $0x4] sm:$0xf]
    %v928 = vld [vmem:[#allocation4 + $0x8] sm:$0xff]
    %v929 = vld [vmem:[#allocation4 + $0x10] sm:$0xff]
    %v930 = vld [vmem:[#allocation4 + $0x18] sm:$0xff]
    %v931 = vld [vmem:[#allocation4 + $0x20] sm:$0xff]
    %v932 = vld [vmem:[#allocation4 + $0x28] sm:$0xff]
    %v933 = vld [vmem:[#allocation4 + $0x30] sm:$0xff]
    %v934 = vld [vmem:[#allocation4 + $0x38] sm:$0xff]
    %v935 = vld [vmem:[#allocation4 + $0x40] sm:$0xff]
    %v936 = vpack.c.bf16 %v929, %v928
    %v937 = vpack.c.bf16 %v931, %v930
    %v938 = vpack.c.bf16 %v933, %v932
    %v939 = vpack.c.bf16 %v935, %v934
    %s940 = scalar_lea.vmem %s7, 8
    %v941 = vld [vmem:[%s940] sm:$0xf]
    %v942 = vld [vmem:[%s940 + $0x4] sm:$0xf]
    %v945 = vunpack.c.l.b16 %v941
    %v946 = vunpack.c.l.b16 %v942
    %v947 = vpack.c.b16 %v946, %v945
    %v950 = vsel %vm54, %v936, 0
    %v953 = vsel %vm54, %v937, 0
    %v956 = vsel %vm54, %v938, 0
    %v959 = vsel %vm54, %v939, 0
    %961 = vmatprep.subr.bf16.mxu0 0
    %962 = vmatpush1.bf16.msra.mxu0 %v947
    %963 = vmatprep.subr.bf16.mxu0 0
    %964 = vmatpush1.bf16.msra.mxu0 0
    %965 = vmatprep.subr.bf16.mxu0 0
    %966 = vmatpush1.bf16.msra.mxu0 0
    %967 = vmatprep.subr.bf16.mxu0 0
    %968 = vmatpush1.bf16.msra.mxu0 0
    %969 = vmatprep.subr.bf16.mxu0 0
    %970 = vmatpush1.bf16.msra.mxu0 0
    %971 = vmatprep.subr.bf16.mxu0 0
    %972 = vmatpush1.bf16.msra.mxu0 0
    %973 = vmatprep.subr.bf16.mxu0 0
    %974 = vmatpush1.bf16.msra.mxu0 0
    %975 = vmatprep.subr.bf16.mxu0 0
    %976 = vmatpush1.bf16.msra.mxu0 0
    %977 = vmatprep.subr.bf16.mxu0 0
    %978 = vmatpush1.bf16.msra.mxu0 0
    %979 = vmatprep.subr.bf16.mxu0 0
    %980 = vmatpush1.bf16.msra.mxu0 0
    %981 = vmatprep.subr.bf16.mxu0 0
    %982 = vmatpush1.bf16.msra.mxu0 0
    %983 = vmatprep.subr.bf16.mxu0 0
    %984 = vmatpush1.bf16.msra.mxu0 0
    %985 = vmatprep.subr.bf16.mxu0 0
    %986 = vmatpush1.bf16.msra.mxu0 0
    %987 = vmatprep.subr.bf16.mxu0 0
    %988 = vmatpush1.bf16.msra.mxu0 0
    %989 = vmatprep.subr.bf16.mxu0 0
    %990 = vmatpush1.bf16.msra.mxu0 0
    %991 = vmatprep.subr.bf16.mxu0 0
    %992 = vmatpush1.bf16.msra.mxu0 0
    %993 = vmatprep.mubr.bf16.mxu0 0
    %994 = vmatmul.mubr.bf16.gmra.mrb[0].mxu0 %v950
    %v995 = vpop.f32.mrb[0].mxu0
    %v996 = vadd.f32 0.0, %v995
    %v997 = vpop.f32.mrb[0].mxu0
    %v998 = vpop.f32.mrb[0].mxu0
    %v999 = vadd.f32 0.0, %v998
    %v1000 = vpop.f32.mrb[0].mxu0
    %1001 = vmatprep.mubr.bf16.mxu0 0
    %1002 = vmatmul.mubr.bf16.gmra.mrb[0].mxu0 %v953
    %v1003 = vpop.f32.mrb[0].mxu0
    %v1004 = vadd.f32 0.0, %v1003
    %v1005 = vpop.f32.mrb[0].mxu0
    %v1006 = vpop.f32.mrb[0].mxu0
    %v1007 = vadd.f32 0.0, %v1006
    %v1008 = vpop.f32.mrb[0].mxu0
    %1009 = vmatprep.mubr.bf16.mxu0 0
    %1010 = vmatmul.mubr.bf16.gmra.mrb[0].mxu0 %v956
    %v1011 = vpop.f32.mrb[0].mxu0
    %v1012 = vadd.f32 0.0, %v1011
    %v1013 = vpop.f32.mrb[0].mxu0
    %v1014 = vpop.f32.mrb[0].mxu0
    %v1015 = vadd.f32 0.0, %v1014
    %v1016 = vpop.f32.mrb[0].mxu0
    %1017 = vmatprep.mubr.bf16.mxu0 0
    %1018 = vmatmul.mubr.bf16.gmra.mrb[0].mxu0 %v959
    %v1019 = vpop.f32.mrb[0].mxu0
    %v1020 = vadd.f32 0.0, %v1019
    %v1021 = vpop.f32.mrb[0].mxu0
    %v1022 = vpop.f32.mrb[0].mxu0
    %v1023 = vadd.f32 0.0, %v1022
    %v1024 = vpop.f32.mrb[0].mxu0
    %1025 = vdwg.mxu0
    %v1028 = vunpack.c.l.b16 %v926
    %v1029 = vunpack.c.l.b16 %v927
    %v1030 = vpack.c.b16 %v1029, %v1028
    %v1033 = vsel %vm54, %v922, 0
    %v1036 = vsel %vm54, %v923, 0
    %v1039 = vsel %vm54, %v924, 0
    %v1042 = vsel %vm54, %v925, 0
    %1044 = vmatprep.subr.bf16.mxu0 0
    %1045 = vmatpush1.bf16.msra.mxu0 %v1030
    %1046 = vmatprep.subr.bf16.mxu0 0
    %1047 = vmatpush1.bf16.msra.mxu0 0
    %1048 = vmatprep.subr.bf16.mxu0 0
    %1049 = vmatpush1.bf16.msra.mxu0 0
    %1050 = vmatprep.subr.bf16.mxu0 0
    %1051 = vmatpush1.bf16.msra.mxu0 0
    %1052 = vmatprep.subr.bf16.mxu0 0
    %1053 = vmatpush1.bf16.msra.mxu0 0
    %1054 = vmatprep.subr.bf16.mxu0 0
    %1055 = vmatpush1.bf16.msra.mxu0 0
    %1056 = vmatprep.subr.bf16.mxu0 0
    %1057 = vmatpush1.bf16.msra.mxu0 0
    %1058 = vmatprep.subr.bf16.mxu0 0
    %1059 = vmatpush1.bf16.msra.mxu0 0
    %1060 = vmatprep.subr.bf16.mxu0 0
    %1061 = vmatpush1.bf16.msra.mxu0 0
    %1062 = vmatprep.subr.bf16.mxu0 0
    %1063 = vmatpush1.bf16.msra.mxu0 0
    %1064 = vmatprep.subr.bf16.mxu0 0
    %1065 = vmatpush1.bf16.msra.mxu0 0
    %1066 = vmatprep.subr.bf16.mxu0 0
    %1067 = vmatpush1.bf16.msra.mxu0 0
    %1068 = vmatprep.subr.bf16.mxu0 0
    %1069 = vmatpush1.bf16.msra.mxu0 0
    %1070 = vmatprep.subr.bf16.mxu0 0
    %1071 = vmatpush1.bf16.msra.mxu0 0
    %1072 = vmatprep.subr.bf16.mxu0 0
    %1073 = vmatpush1.bf16.msra.mxu0 0
    %1074 = vmatprep.subr.bf16.mxu0 0
    %1075 = vmatpush1.bf16.msra.mxu0 0
    %1076 = vmatprep.mubr.bf16.mxu0 0
    %1077 = vmatmul.mubr.bf16.gmra.mrb[0].mxu0 %v1033
    %v1078 = vpop.f32.mrb[0].mxu0
    %v1079 = vadd.f32 %v996, %v1078
    %v1080 = vpop.f32.mrb[0].mxu0
    %v1081 = vpop.f32.mrb[0].mxu0
    %v1082 = vadd.f32 %v999, %v1081
    %v1083 = vpop.f32.mrb[0].mxu0
    %1084 = vmatprep.mubr.bf16.mxu0 0
    %1085 = vmatmul.mubr.bf16.gmra.mrb[0].mxu0 %v1036
    %v1086 = vpop.f32.mrb[0].mxu0
    %v1087 = vadd.f32 %v1004, %v1086
    %v1088 = vpop.f32.mrb[0].mxu0
    %v1089 = vpop.f32.mrb[0].mxu0
    %v1090 = vadd.f32 %v1007, %v1089
    %v1091 = vpop.f32.mrb[0].mxu0
    %1092 = vmatprep.mubr.bf16.mxu0 0
    %1093 = vmatmul.mubr.bf16.gmra.mrb[0].mxu0 %v1039
    %v1094 = vpop.f32.mrb[0].mxu0
    %v1095 = vadd.f32 %v1012, %v1094
    %v1096 = vpop.f32.mrb[0].mxu0
    %v1097 = vpop.f32.mrb[0].mxu0
    %v1098 = vadd.f32 %v1015, %v1097
    %v1099 = vpop.f32.mrb[0].mxu0
    %1100 = vmatprep.mubr.bf16.mxu0 0
    %1101 = vmatmul.mubr.bf16.gmra.mrb[0].mxu0 %v1042
    %v1102 = vpop.f32.mrb[0].mxu0
    %v1103 = vadd.f32 %v1020, %v1102
    %v1104 = vpop.f32.mrb[0].mxu0
    %v1105 = vpop.f32.mrb[0].mxu0
    %v1106 = vadd.f32 %v1023, %v1105
    %v1107 = vpop.f32.mrb[0].mxu0
    %1108 = vdwg.mxu0
    %v1109 = vld [vmem:[#allocation4 + $0x9] sm:$0xff]
    %v1110 = vld [vmem:[#allocation4 + $0x11] sm:$0xff]
    %v1111 = vld [vmem:[#allocation4 + $0x19] sm:$0xff]
    %v1112 = vld [vmem:[#allocation4 + $0x21] sm:$0xff]
    %v1113 = vld [vmem:[#allocation4 + $0x29] sm:$0xff]
    %v1114 = vld [vmem:[#allocation4 + $0x31] sm:$0xff]
    %v1115 = vld [vmem:[#allocation4 + $0x39] sm:$0xff]
    %v1116 = vld [vmem:[#allocation4 + $0x41] sm:$0xff]
    %v1117 = vpack.c.bf16 %v1110, %v1109
    %v1118 = vpack.c.bf16 %v1112, %v1111
    %v1119 = vpack.c.bf16 %v1114, %v1113
    %v1120 = vpack.c.bf16 %v1116, %v1115
    %s1121 = scalar_lea.vmem %s7, 16
    %v1122 = vld [vmem:[%s1121] sm:$0xf]
    %v1123 = vld [vmem:[%s1121 + $0x4] sm:$0xf]
    %v1126 = vunpack.c.l.b16 %v1122
    %v1127 = vunpack.c.l.b16 %v1123
    %v1128 = vpack.c.b16 %v1127, %v1126
    %v1131 = vsel %vm54, %v1117, 0
    %v1134 = vsel %vm54, %v1118, 0
    %v1137 = vsel %vm54, %v1119, 0
    %v1140 = vsel %vm54, %v1120, 0
    %1142 = vmatprep.subr.bf16.mxu0 0
    %1143 = vmatpush1.bf16.msra.mxu0 %v1128
    %1144 = vmatprep.subr.bf16.mxu0 0
    %1145 = vmatpush1.bf16.msra.mxu0 0
    %1146 = vmatprep.subr.bf16.mxu0 0
    %1147 = vmatpush1.bf16.msra.mxu0 0
    %1148 = vmatprep.subr.bf16.mxu0 0
    %1149 = vmatpush1.bf16.msra.mxu0 0
    %1150 = vmatprep.subr.bf16.mxu0 0
    %1151 = vmatpush1.bf16.msra.mxu0 0
    %1152 = vmatprep.subr.bf16.mxu0 0
    %1153 = vmatpush1.bf16.msra.mxu0 0
    %1154 = vmatprep.subr.bf16.mxu0 0
    %1155 = vmatpush1.bf16.msra.mxu0 0
    %1156 = vmatprep.subr.bf16.mxu0 0
    %1157 = vmatpush1.bf16.msra.mxu0 0
    %1158 = vmatprep.subr.bf16.mxu0 0
    %1159 = vmatpush1.bf16.msra.mxu0 0
    %1160 = vmatprep.subr.bf16.mxu0 0
    %1161 = vmatpush1.bf16.msra.mxu0 0
    %1162 = vmatprep.subr.bf16.mxu0 0
    %1163 = vmatpush1.bf16.msra.mxu0 0
    %1164 = vmatprep.subr.bf16.mxu0 0
    %1165 = vmatpush1.bf16.msra.mxu0 0
    %1166 = vmatprep.subr.bf16.mxu0 0
    %1167 = vmatpush1.bf16.msra.mxu0 0
    %1168 = vmatprep.subr.bf16.mxu0 0
    %1169 = vmatpush1.bf16.msra.mxu0 0
    %1170 = vmatprep.subr.bf16.mxu0 0
    %1171 = vmatpush1.bf16.msra.mxu0 0
    %1172 = vmatprep.subr.bf16.mxu0 0
    %1173 = vmatpush1.bf16.msra.mxu0 0
    %1174 = vmatprep.mubr.bf16.mxu0 0
    %1175 = vmatmul.mubr.bf16.gmra.mrb[0].mxu0 %v1131
    %v1176 = vpop.f32.mrb[0].mxu0
    %v1177 = vadd.f32 0.0, %v1176
    %v1178 = vpop.f32.mrb[0].mxu0
    %v1179 = vpop.f32.mrb[0].mxu0
    %v1180 = vadd.f32 0.0, %v1179
    %v1181 = vpop.f32.mrb[0].mxu0
    %1182 = vmatprep.mubr.bf16.mxu0 0
    %1183 = vmatmul.mubr.bf16.gmra.mrb[0].mxu0 %v1134
    %v1184 = vpop.f32.mrb[0].mxu0
    %v1185 = vadd.f32 0.0, %v1184
    %v1186 = vpop.f32.mrb[0].mxu0
    %v1187 = vpop.f32.mrb[0].mxu0
    %v1188 = vadd.f32 0.0, %v1187
    %v1189 = vpop.f32.mrb[0].mxu0
    %1190 = vmatprep.mubr.bf16.mxu0 0
    %1191 = vmatmul.mubr.bf16.gmra.mrb[0].mxu0 %v1137
    %v1192 = vpop.f32.mrb[0].mxu0
    %v1193 = vadd.f32 0.0, %v1192
    %v1194 = vpop.f32.mrb[0].mxu0
    %v1195 = vpop.f32.mrb[0].mxu0
    %v1196 = vadd.f32 0.0, %v1195
    %v1197 = vpop.f32.mrb[0].mxu0
    %1198 = vmatprep.mubr.bf16.mxu0 0
    %1199 = vmatmul.mubr.bf16.gmra.mrb[0].mxu0 %v1140
    %v1200 = vpop.f32.mrb[0].mxu0
    %v1201 = vadd.f32 0.0, %v1200
    %v1202 = vpop.f32.mrb[0].mxu0
    %v1203 = vpop.f32.mrb[0].mxu0
    %v1204 = vadd.f32 0.0, %v1203
    %v1205 = vpop.f32.mrb[0].mxu0
    %1206 = vdwg.mxu0
    %v1207 = vadd.f32 %v1079, %v1177
    %v1208 = vadd.f32 %v1082, %v1180
    %v1209 = vadd.f32 %v1087, %v1185
    %v1210 = vadd.f32 %v1090, %v1188
    %v1211 = vadd.f32 %v1095, %v1193
    %v1212 = vadd.f32 %v1098, %v1196
    %v1213 = vadd.f32 %v1103, %v1201
    %v1214 = vadd.f32 %v1106, %v1204
    %v1215 = vld [vmem:[%s8] sm:$0x1]
    %v1217 = vlaneseq
    %v1218 = vshrl.u32 %v1217, 7
    %v1219 = vsub.s32 0, %v1218
    %v1220 = vrot.slane %v1215, %v1219
    %v1222 = vadd.f32 %v1207, %v1220
    %v1223 = vadd.f32 %v1208, %v1220
    %v1224 = vadd.f32 %v1209, %v1220
    %v1225 = vadd.f32 %v1210, %v1220
    %v1226 = vadd.f32 %v1211, %v1220
    %v1227 = vadd.f32 %v1212, %v1220
    %v1228 = vadd.f32 %v1213, %v1220
    %v1229 = vadd.f32 %v1214, %v1220
    %v1230 = vmax.f32 %v1222, 0.0
    %v1231 = vmax.f32 %v1223, 0.0
    %v1232 = vmax.f32 %v1224, 0.0
    %v1233 = vmax.f32 %v1225, 0.0
    %v1234 = vmax.f32 %v1226, 0.0
    %v1235 = vmax.f32 %v1227, 0.0
    %v1236 = vmax.f32 %v1228, 0.0
    %v1237 = vmax.f32 %v1229, 0.0
    %v1238 = vmul.f32 %v1230, %v460
    %v1239 = vmul.f32 %v1231, %v465
    %v1240 = vmul.f32 %v1232, %v470
    %v1241 = vmul.f32 %v1233, %v475
    %v1242 = vmul.f32 %v1234, %v480
    %v1243 = vmul.f32 %v1235, %v485
    %v1244 = vmul.f32 %v1236, %v490
    %v1245 = vmul.f32 %v1237, %v495
    %1246 = vst.msk [vmem:[#allocation3 + $0x8] sm:$0xff] %vm51, %v1238
    %1247 = vst.msk [vmem:[#allocation3 + $0x10] sm:$0xff] %vm51, %v1239
    %1248 = vst.msk [vmem:[#allocation3 + $0x18] sm:$0xff] %vm51, %v1240
    %1249 = vst.msk [vmem:[#allocation3 + $0x20] sm:$0xff] %vm51, %v1241
    %1250 = vst.msk [vmem:[#allocation3 + $0x28] sm:$0xff] %vm51, %v1242
    %1251 = vst.msk [vmem:[#allocation3 + $0x30] sm:$0xff] %vm51, %v1243
    %1252 = vst.msk [vmem:[#allocation3 + $0x38] sm:$0xff] %vm51, %v1244
    %1253 = vst.msk [vmem:[#allocation3 + $0x40] sm:$0xff] %vm51, %v1245
    %v1254 = vld [vmem:[#allocation3 + $0x7] sm:$0xff]
    %v1255 = vld [vmem:[#allocation3 + $0xf] sm:$0xff]
    %v1256 = vld [vmem:[#allocation3 + $0x17] sm:$0xff]
    %v1257 = vld [vmem:[#allocation3 + $0x1f] sm:$0xff]
    %v1258 = vld [vmem:[#allocation3 + $0x27] sm:$0xff]
    %v1259 = vld [vmem:[#allocation3 + $0x2f] sm:$0xff]
    %v1260 = vld [vmem:[#allocation3 + $0x37] sm:$0xff]
    %v1261 = vld [vmem:[#allocation3 + $0x3f] sm:$0xff]
    %v1262 = vpack.c.bf16 %v1255, %v1254
    %v1263 = vpack.c.bf16 %v1257, %v1256
    %v1264 = vpack.c.bf16 %v1259, %v1258
    %v1265 = vpack.c.bf16 %v1261, %v1260
    %v1266 = vld [vmem:[%s9] sm:$0xf]
    %v1267 = vld [vmem:[#allocation3 + $0x8] sm:$0xff]
    %v1268 = vld [vmem:[#allocation3 + $0x10] sm:$0xff]
    %v1269 = vld [vmem:[#allocation3 + $0x18] sm:$0xff]
    %v1270 = vld [vmem:[#allocation3 + $0x20] sm:$0xff]
    %v1271 = vld [vmem:[#allocation3 + $0x28] sm:$0xff]
    %v1272 = vld [vmem:[#allocation3 + $0x30] sm:$0xff]
    %v1273 = vld [vmem:[#allocation3 + $0x38] sm:$0xff]
    %v1274 = vld [vmem:[#allocation3 + $0x40] sm:$0xff]
    %v1275 = vpack.c.bf16 %v1268, %v1267
    %v1276 = vpack.c.bf16 %v1270, %v1269
    %v1277 = vpack.c.bf16 %v1272, %v1271
    %v1278 = vpack.c.bf16 %v1274, %v1273
    %s1279 = scalar_lea.vmem %s9, 4
    %v1280 = vld [vmem:[%s1279] sm:$0xf]
    %v1282 = vsel %vm51, %v1275, 0
    %v1285 = vsel %vm51, %v1276, 0
    %v1288 = vsel %vm51, %v1277, 0
    %v1291 = vsel %vm51, %v1278, 0
    %v1294 = vsel %vm552, %v1280, 0
    %1296 = vmatprep.subr.bf16.mxu0 0
    %1297 = vmatpush1.bf16.msra.mxu0 %v1294
    %1298 = vmatprep.subr.bf16.mxu0 0
    %1299 = vmatpush1.bf16.msra.mxu0 0
    %1300 = vmatprep.subr.bf16.mxu0 0
    %1301 = vmatpush1.bf16.msra.mxu0 0
    %1302 = vmatprep.subr.bf16.mxu0 0
    %1303 = vmatpush1.bf16.msra.mxu0 0
    %1304 = vmatprep.subr.bf16.mxu0 0
    %1305 = vmatpush1.bf16.msra.mxu0 0
    %1306 = vmatprep.subr.bf16.mxu0 0
    %1307 = vmatpush1.bf16.msra.mxu0 0
    %1308 = vmatprep.subr.bf16.mxu0 0
    %1309 = vmatpush1.bf16.msra.mxu0 0
    %1310 = vmatprep.subr.bf16.mxu0 0
    %1311 = vmatpush1.bf16.msra.mxu0 0
    %1312 = vmatprep.subr.bf16.mxu0 0
    %1313 = vmatpush1.bf16.msra.mxu0 0
    %1314 = vmatprep.subr.bf16.mxu0 0
    %1315 = vmatpush1.bf16.msra.mxu0 0
    %1316 = vmatprep.subr.bf16.mxu0 0
    %1317 = vmatpush1.bf16.msra.mxu0 0
    %1318 = vmatprep.subr.bf16.mxu0 0
    %1319 = vmatpush1.bf16.msra.mxu0 0
    %1320 = vmatprep.subr.bf16.mxu0 0
    %1321 = vmatpush1.bf16.msra.mxu0 0
    %1322 = vmatprep.subr.bf16.mxu0 0
    %1323 = vmatpush1.bf16.msra.mxu0 0
    %1324 = vmatprep.subr.bf16.mxu0 0
    %1325 = vmatpush1.bf16.msra.mxu0 0
    %1326 = vmatprep.subr.bf16.mxu0 0
    %1327 = vmatpush1.bf16.msra.mxu0 0
    %1328 = vmatprep.mubr.bf16.mxu0 0
    %1329 = vmatmul.mubr.bf16.gmra.mrb[0].mxu0 %v1282
    %v1330 = vpop.f32.mrb[0].mxu0
    %v1331 = vpop.f32.mrb[0].mxu0
    %v1332 = vpop.f32.mrb[0].mxu0
    %v1333 = vadd.f32 0.0, %v1332
    %v1334 = vpop.f32.mrb[0].mxu0
    %1335 = vmatprep.mubr.bf16.mxu0 0
    %1336 = vmatmul.mubr.bf16.gmra.mrb[0].mxu0 %v1285
    %v1337 = vpop.f32.mrb[0].mxu0
    %v1338 = vadd.f32 0.0, %v1337
    %v1339 = vpop.f32.mrb[0].mxu0
    %v1340 = vpop.f32.mrb[0].mxu0
    %v1341 = vpop.f32.mrb[0].mxu0
    %1342 = vmatprep.mubr.bf16.mxu0 0
    %1343 = vmatmul.mubr.bf16.gmra.mrb[0].mxu0 %v1288
    %v1344 = vpop.f32.mrb[0].mxu0
    %v1345 = vpop.f32.mrb[0].mxu0
    %v1346 = vpop.f32.mrb[0].mxu0
    %v1347 = vadd.f32 0.0, %v1346
    %v1348 = vpop.f32.mrb[0].mxu0
    %1349 = vmatprep.mubr.bf16.mxu0 0
    %1350 = vmatmul.mubr.bf16.gmra.mrb[0].mxu0 %v1291
    %v1351 = vpop.f32.mrb[0].mxu0
    %v1352 = vadd.f32 0.0, %v1351
    %v1353 = vpop.f32.mrb[0].mxu0
    %v1354 = vpop.f32.mrb[0].mxu0
    %v1355 = vpop.f32.mrb[0].mxu0
    %1356 = vdwg.mxu0
    %v1358 = vsel %vm51, %v1262, 0
    %v1361 = vsel %vm51, %v1263, 0
    %v1364 = vsel %vm51, %v1264, 0
    %v1367 = vsel %vm51, %v1265, 0
    %v1370 = vsel %vm552, %v1266, 0
    %1372 = vmatprep.subr.bf16.mxu0 0
    %1373 = vmatpush1.bf16.msra.mxu0 %v1370
    %1374 = vmatprep.subr.bf16.mxu0 0
    %1375 = vmatpush1.bf16.msra.mxu0 0
    %1376 = vmatprep.subr.bf16.mxu0 0
    %1377 = vmatpush1.bf16.msra.mxu0 0
    %1378 = vmatprep.subr.bf16.mxu0 0
    %1379 = vmatpush1.bf16.msra.mxu0 0
    %1380 = vmatprep.subr.bf16.mxu0 0
    %1381 = vmatpush1.bf16.msra.mxu0 0
    %1382 = vmatprep.subr.bf16.mxu0 0
    %1383 = vmatpush1.bf16.msra.mxu0 0
    %1384 = vmatprep.subr.bf16.mxu0 0
    %1385 = vmatpush1.bf16.msra.mxu0 0
    %1386 = vmatprep.subr.bf16.mxu0 0
    %1387 = vmatpush1.bf16.msra.mxu0 0
    %1388 = vmatprep.subr.bf16.mxu0 0
    %1389 = vmatpush1.bf16.msra.mxu0 0
    %1390 = vmatprep.subr.bf16.mxu0 0
    %1391 = vmatpush1.bf16.msra.mxu0 0
    %1392 = vmatprep.subr.bf16.mxu0 0
    %1393 = vmatpush1.bf16.msra.mxu0 0
    %1394 = vmatprep.subr.bf16.mxu0 0
    %1395 = vmatpush1.bf16.msra.mxu0 0
    %1396 = vmatprep.subr.bf16.mxu0 0
    %1397 = vmatpush1.bf16.msra.mxu0 0
    %1398 = vmatprep.subr.bf16.mxu0 0
    %1399 = vmatpush1.bf16.msra.mxu0 0
    %1400 = vmatprep.subr.bf16.mxu0 0
    %1401 = vmatpush1.bf16.msra.mxu0 0
    %1402 = vmatprep.subr.bf16.mxu0 0
    %1403 = vmatpush1.bf16.msra.mxu0 0
    %1404 = vmatprep.mubr.bf16.mxu0 0
    %1405 = vmatmul.mubr.bf16.gmra.mrb[0].mxu0 %v1358
    %v1406 = vpop.f32.mrb[0].mxu0
    %v1407 = vpop.f32.mrb[0].mxu0
    %v1408 = vpop.f32.mrb[0].mxu0
    %v1409 = vadd.f32 %v1333, %v1408
    %v1410 = vpop.f32.mrb[0].mxu0
    %1411 = vmatprep.mubr.bf16.mxu0 0
    %1412 = vmatmul.mubr.bf16.gmra.mrb[0].mxu0 %v1361
    %v1413 = vpop.f32.mrb[0].mxu0
    %v1414 = vadd.f32 %v1338, %v1413
    %v1415 = vpop.f32.mrb[0].mxu0
    %v1416 = vpop.f32.mrb[0].mxu0
    %v1417 = vpop.f32.mrb[0].mxu0
    %1418 = vmatprep.mubr.bf16.mxu0 0
    %1419 = vmatmul.mubr.bf16.gmra.mrb[0].mxu0 %v1364
    %v1420 = vpop.f32.mrb[0].mxu0
    %v1421 = vpop.f32.mrb[0].mxu0
    %v1422 = vpop.f32.mrb[0].mxu0
    %v1423 = vadd.f32 %v1347, %v1422
    %v1424 = vpop.f32.mrb[0].mxu0
    %1425 = vmatprep.mubr.bf16.mxu0 0
    %1426 = vmatmul.mubr.bf16.gmra.mrb[0].mxu0 %v1367
    %v1427 = vpop.f32.mrb[0].mxu0
    %v1428 = vadd.f32 %v1352, %v1427
    %v1429 = vpop.f32.mrb[0].mxu0
    %v1430 = vpop.f32.mrb[0].mxu0
    %v1431 = vpop.f32.mrb[0].mxu0
    %1432 = vdwg.mxu0
    %v1433 = vld [vmem:[#allocation3 + $0x9] sm:$0xff]
    %v1434 = vld [vmem:[#allocation3 + $0x11] sm:$0xff]
    %v1435 = vld [vmem:[#allocation3 + $0x19] sm:$0xff]
    %v1436 = vld [vmem:[#allocation3 + $0x21] sm:$0xff]
    %v1437 = vld [vmem:[#allocation3 + $0x29] sm:$0xff]
    %v1438 = vld [vmem:[#allocation3 + $0x31] sm:$0xff]
    %v1439 = vld [vmem:[#allocation3 + $0x39] sm:$0xff]
    %v1440 = vld [vmem:[#allocation3 + $0x41] sm:$0xff]
    %v1441 = vpack.c.bf16 %v1434, %v1433
    %v1442 = vpack.c.bf16 %v1436, %v1435
    %v1443 = vpack.c.bf16 %v1438, %v1437
    %v1444 = vpack.c.bf16 %v1440, %v1439
    %s1445 = scalar_lea.vmem %s9, 8
    %v1446 = vld [vmem:[%s1445] sm:$0xf]
    %v1448 = vsel %vm51, %v1441, 0
    %v1451 = vsel %vm51, %v1442, 0
    %v1454 = vsel %vm51, %v1443, 0
    %v1457 = vsel %vm51, %v1444, 0
    %v1460 = vsel %vm552, %v1446, 0
    %1462 = vmatprep.subr.bf16.mxu0 0
    %1463 = vmatpush1.bf16.msra.mxu0 %v1460
    %1464 = vmatprep.subr.bf16.mxu0 0
    %1465 = vmatpush1.bf16.msra.mxu0 0
    %1466 = vmatprep.subr.bf16.mxu0 0
    %1467 = vmatpush1.bf16.msra.mxu0 0
    %1468 = vmatprep.subr.bf16.mxu0 0
    %1469 = vmatpush1.bf16.msra.mxu0 0
    %1470 = vmatprep.subr.bf16.mxu0 0
    %1471 = vmatpush1.bf16.msra.mxu0 0
    %1472 = vmatprep.subr.bf16.mxu0 0
    %1473 = vmatpush1.bf16.msra.mxu0 0
    %1474 = vmatprep.subr.bf16.mxu0 0
    %1475 = vmatpush1.bf16.msra.mxu0 0
    %1476 = vmatprep.subr.bf16.mxu0 0
    %1477 = vmatpush1.bf16.msra.mxu0 0
    %1478 = vmatprep.subr.bf16.mxu0 0
    %1479 = vmatpush1.bf16.msra.mxu0 0
    %1480 = vmatprep.subr.bf16.mxu0 0
    %1481 = vmatpush1.bf16.msra.mxu0 0
    %1482 = vmatprep.subr.bf16.mxu0 0
    %1483 = vmatpush1.bf16.msra.mxu0 0
    %1484 = vmatprep.subr.bf16.mxu0 0
    %1485 = vmatpush1.bf16.msra.mxu0 0
    %1486 = vmatprep.subr.bf16.mxu0 0
    %1487 = vmatpush1.bf16.msra.mxu0 0
    %1488 = vmatprep.subr.bf16.mxu0 0
    %1489 = vmatpush1.bf16.msra.mxu0 0
    %1490 = vmatprep.subr.bf16.mxu0 0
    %1491 = vmatpush1.bf16.msra.mxu0 0
    %1492 = vmatprep.subr.bf16.mxu0 0
    %1493 = vmatpush1.bf16.msra.mxu0 0
    %1494 = vmatprep.mubr.bf16.mxu0 0
    %1495 = vmatmul.mubr.bf16.gmra.mrb[0].mxu0 %v1448
    %v1496 = vpop.f32.mrb[0].mxu0
    %v1497 = vpop.f32.mrb[0].mxu0
    %v1498 = vpop.f32.mrb[0].mxu0
    %v1499 = vadd.f32 0.0, %v1498
    %v1500 = vpop.f32.mrb[0].mxu0
    %1501 = vmatprep.mubr.bf16.mxu0 0
    %1502 = vmatmul.mubr.bf16.gmra.mrb[0].mxu0 %v1451
    %v1503 = vpop.f32.mrb[0].mxu0
    %v1504 = vadd.f32 0.0, %v1503
    %v1505 = vpop.f32.mrb[0].mxu0
    %v1506 = vpop.f32.mrb[0].mxu0
    %v1507 = vpop.f32.mrb[0].mxu0
    %1508 = vmatprep.mubr.bf16.mxu0 0
    %1509 = vmatmul.mubr.bf16.gmra.mrb[0].mxu0 %v1454
    %v1510 = vpop.f32.mrb[0].mxu0
    %v1511 = vpop.f32.mrb[0].mxu0
    %v1512 = vpop.f32.mrb[0].mxu0
    %v1513 = vadd.f32 0.0, %v1512
    %v1514 = vpop.f32.mrb[0].mxu0
    %1515 = vmatprep.mubr.bf16.mxu0 0
    %1516 = vmatmul.mubr.bf16.gmra.mrb[0].mxu0 %v1457
    %v1517 = vpop.f32.mrb[0].mxu0
    %v1518 = vadd.f32 0.0, %v1517
    %v1519 = vpop.f32.mrb[0].mxu0
    %v1520 = vpop.f32.mrb[0].mxu0
    %v1521 = vpop.f32.mrb[0].mxu0
    %1522 = vdwg.mxu0
    %v1523 = vadd.f32 %v1409, %v1499
    %v1524 = vadd.f32 %v1414, %v1504
    %v1525 = vadd.f32 %v1423, %v1513
    %v1526 = vadd.f32 %v1428, %v1518
    %v1527 = vld [vmem:[%s10] sm:$0x1]
    %v1529 = vlaneseq
    %v1530 = vshrl.u32 %v1529, 7
    %v1531 = vsub.s32 0, %v1530
    %v1532 = vrot.slane %v1527, %v1531
    %v1534 = vadd.f32 %v1523, %v1532
    %v1535 = vadd.f32 %v1524, %v1532
    %v1536 = vadd.f32 %v1525, %v1532
    %v1537 = vadd.f32 %v1526, %v1532
    %1538 = vxpose.xlu0.b32.start [1/16] %v1534, 128
    %1539 = vxpose.xlu0.b32.cont [2/16] %v1535, 128
    %1540 = vxpose.xlu0.b32.cont [3/16] 0.0, 128
    %1541 = vxpose.xlu0.b32.cont [4/16] 0.0, 128
    %1542 = vxpose.xlu0.b32.cont [5/16] 0.0, 128
    %1543 = vxpose.xlu0.b32.cont [6/16] 0.0, 128
    %1544 = vxpose.xlu0.b32.cont [7/16] 0.0, 128
    %1545 = vxpose.xlu0.b32.cont [8/16] 0.0, 128
    %1546 = vxpose.xlu0.b32.cont [9/16] 0.0, 128
    %1547 = vxpose.xlu0.b32.cont [10/16] 0.0, 128
    %1548 = vxpose.xlu0.b32.cont [11/16] 0.0, 128
    %1549 = vxpose.xlu0.b32.cont [12/16] 0.0, 128
    %1550 = vxpose.xlu0.b32.cont [13/16] 0.0, 128
    %1551 = vxpose.xlu0.b32.cont [14/16] 0.0, 128
    %1552 = vxpose.xlu0.b32.cont [15/16] 0.0, 128
    %1553 = vxpose.xlu0.b32.end [16/16] 0.0, 128
    %v1554 = vpop.trf.xlu0
    %v1555 = vpop.trf.xlu0
    %v1556 = vpop.trf.xlu0
    %v1557 = vpop.trf.xlu0
    %v1558 = vpop.trf.xlu0
    %v1559 = vpop.trf.xlu0
    %v1560 = vpop.trf.xlu0
    %v1561 = vpop.trf.xlu0
    %v1562 = vpop.trf.xlu0
    %v1563 = vpop.trf.xlu0
    %v1564 = vpop.trf.xlu0
    %v1565 = vpop.trf.xlu0
    %v1566 = vpop.trf.xlu0
    %v1567 = vpop.trf.xlu0
    %v1568 = vpop.trf.xlu0
    %v1569 = vpop.trf.xlu0
    %vm1570 = vcmask 123904
    %1571 = vst.msk [vmem:[#allocation5] sm:$0x3] %vm1570, %v1554
    %1572 = vxpose.xlu0.b32.start [1/16] %v1536, 128
    %1573 = vxpose.xlu0.b32.cont [2/16] %v1537, 128
    %1574 = vxpose.xlu0.b32.cont [3/16] 0.0, 128
    %1575 = vxpose.xlu0.b32.cont [4/16] 0.0, 128
    %1576 = vxpose.xlu0.b32.cont [5/16] 0.0, 128
    %1577 = vxpose.xlu0.b32.cont [6/16] 0.0, 128
    %1578 = vxpose.xlu0.b32.cont [7/16] 0.0, 128
    %1579 = vxpose.xlu0.b32.cont [8/16] 0.0, 128
    %1580 = vxpose.xlu0.b32.cont [9/16] 0.0, 128
    %1581 = vxpose.xlu0.b32.cont [10/16] 0.0, 128
    %1582 = vxpose.xlu0.b32.cont [11/16] 0.0, 128
    %1583 = vxpose.xlu0.b32.cont [12/16] 0.0, 128
    %1584 = vxpose.xlu0.b32.cont [13/16] 0.0, 128
    %1585 = vxpose.xlu0.b32.cont [14/16] 0.0, 128
    %1586 = vxpose.xlu0.b32.cont [15/16] 0.0, 128
    %1587 = vxpose.xlu0.b32.end [16/16] 0.0, 128
    %v1588 = vpop.trf.xlu0
    %v1589 = vpop.trf.xlu0
    %v1590 = vpop.trf.xlu0
    %v1591 = vpop.trf.xlu0
    %v1592 = vpop.trf.xlu0
    %v1593 = vpop.trf.xlu0
    %v1594 = vpop.trf.xlu0
    %v1595 = vpop.trf.xlu0
    %v1596 = vpop.trf.xlu0
    %v1597 = vpop.trf.xlu0
    %v1598 = vpop.trf.xlu0
    %v1599 = vpop.trf.xlu0
    %v1600 = vpop.trf.xlu0
    %v1601 = vpop.trf.xlu0
    %v1602 = vpop.trf.xlu0
    %v1603 = vpop.trf.xlu0
    %s1604 = scalar_lea.vmem [#allocation5], 2
    %1605 = vst.msk [vmem:[%s1604] sm:$0x3] %vm1570, %v1588
    // Predicated region
    $region46: #{bayesnn_forward.1} parent=1 // pred_check
      _
    $region47: #{bayesnn_forward.1} parent=1 // pred_check_branch
      %1607 = sbr.rel (0) target = $region49
    $region48: #{bayesnn_forward.1} parent=1 // pred_region
      %s1609 = ssub.s32 64, 64
      %1610 = vsyncadd [#allocation6], %s1609
      %s1611 = sshll.u32 [#allocation5], 4
      %s1612 = int_to_ptr.vmem [resolvable:$true] %s1611
      %1617 = dma.vmem_to_hbm [thread:$0]  %s1612, 64, %s11, [#allocation6], 32, 32, 2
    $region49: #{bayesnn_forward.1} parent=1 // pred_fallthru
      _
    // Predicated region
    $region50: #{bayesnn_forward.1} parent=1 // pred_check
      _
    $region51: #{bayesnn_forward.1} parent=1 // pred_check_branch
      %1619 = sbr.rel (0) target = $region53
    $region52: #{bayesnn_forward.1} parent=1 // pred_region
      %1620 = dma.done [#allocation6], 64
    $region53: #{bayesnn_forward.1} parent=1 // pred_fallthru
      _
    %1621 = vsyncpa [#allocation6], 1

</llo_original>
